<compile_context>
chip_gen: v7x
topology: tpu7x:2x2x1
jax: 0.10.0
libtpu: 0.0.40
codegen_flags: <defaults>
</compile_context>

<pallas_src>
import math

import jax
import jax.numpy as jnp
from jax.experimental import pallas as pl
from jax.experimental.pallas import tpu as pltpu

# ----------------------- small synthetic config -----------------------------
HIDDEN = 128          # config.hidden_size  (kept a multiple of 128: lane-dense)
HEADS = 4             # config.num_attention_heads
HEAD_DIM = HIDDEN // HEADS
INTER = 256           # config.intermediate_size
NUM_LAYERS = 2        # config.num_hidden_layers
EPS = 1e-6            # config.layer_norm_eps
SEQ = 16
BATCH = 2

COMPUTE_DTYPE = jnp.bfloat16   # MXU operand dtype (accumulation stays f32)

# rows of the packed bias / LayerNorm operand
VEC_ROWS = 10
(_LN1_G, _LN1_B, _LN2_G, _LN2_B,
 _BQ, _BK, _BV, _BO, _FC2_B, _FC1_B) = range(VEC_ROWS)


# ----------------------------- shared math helpers ----------------------------
def _gelu_pytorch_tanh(x):
    c = math.sqrt(2.0 / math.pi)
    return 0.5 * x * (1.0 + jnp.tanh(c * (x + 0.044715 * x * x * x)))


def _layernorm(x, gamma, beta, eps):
    mu = jnp.mean(x, axis=-1, keepdims=True)
    var = jnp.mean((x - mu) * (x - mu), axis=-1, keepdims=True)
    return (x - mu) * jax.lax.rsqrt(var + eps) * gamma + beta


# ------------------------------- Pallas kernel --------------------------------
def _make_layer_kernel(seq, hidden, heads, head_dim, eps, compute_dtype):
    def kernel(x_ref, wq_ref, wk_ref, wv_ref, wo_ref, fc1_ref, fc2_ref, vec_ref,
               o_ref, qh_scr, kh_scr, vh_scr):
        x = x_ref[0]                                   # (S, D) f32, one batch item
        vecs = vec_ref[...]                            # (10, INTER) f32
        ln1_g = vecs[_LN1_G:_LN1_G + 1, :hidden]
        ln1_b = vecs[_LN1_B:_LN1_B + 1, :hidden]
        ln2_g = vecs[_LN2_G:_LN2_G + 1, :hidden]
        ln2_b = vecs[_LN2_B:_LN2_B + 1, :hidden]
        bq = vecs[_BQ:_BQ + 1, :hidden]                # 1/sqrt(head_dim) pre-folded
        bk = vecs[_BK:_BK + 1, :hidden]
        bv = vecs[_BV:_BV + 1, :hidden]
        bo = vecs[_BO:_BO + 1, :hidden]
        fc2_b = vecs[_FC2_B:_FC2_B + 1, :hidden]
        fc1_b = vecs[_FC1_B:_FC1_B + 1, :]

        # --- layer_norm1 (f32 stats) + QKV projections (bf16 MXU, f32 acc) ---
        hn = _layernorm(x, ln1_g, ln1_b, eps)
        hc = hn.astype(compute_dtype)
        q = jnp.dot(hc, wq_ref[...], preferred_element_type=jnp.float32) + bq
        k = jnp.dot(hc, wk_ref[...], preferred_element_type=jnp.float32) + bk
        v = jnp.dot(hc, wv_ref[...], preferred_element_type=jnp.float32) + bv

        # --- head split: stage Q/K/V head-major into VMEM scratch.  Pure data
        #     movement (one relayout's worth per tensor); every matmul below is
        #     batched over ALL heads so the MXU never sees per-head tiny dots. ---
        for head in range(heads):
            lane = slice(head * head_dim, (head + 1) * head_dim)
            qh_scr[head] = q[:, lane].astype(compute_dtype)   # (S, hd)
            kh_scr[head] = k[:, lane].astype(compute_dtype)   # (S, hd)
            vh_scr[head] = v[:, lane].astype(compute_dtype)   # (S, hd)
        qh = qh_scr[...]            # (H, S, hd) bf16
        kh = kh_scr[...]            # (H, S, hd) bf16
        vh = vh_scr[...]            # (H, S, hd) bf16

        # --- attention, batched over heads; exact softmax normalization ---
        # TODO(synk): at prod shapes produce K in (H, hd, S) panels (flash-style
        # pipeline) to avoid the implicit per-head K transpose in this einsum.
        scores = jnp.einsum('hqd,hkd->hqk', qh, kh,
                            preferred_element_type=jnp.float32)       # (H, S, S)
        scores = scores - jnp.max(scores, axis=-1, keepdims=True)
        probs = jnp.exp(scores)
        probs = probs / jnp.sum(probs, axis=-1, keepdims=True)
        ctx = jnp.einsum('hqk,hkd->hqd', probs.astype(compute_dtype), vh,
                         preferred_element_type=jnp.float32)          # (H, S, hd)

        # --- out-projection: concat(heads) @ Wo == sum_h ctx_h @ Wo[h]; Wo is
        #     pre-split host-side to (H, hd, D) so this is a single batched
        #     matmul + leading-axis reduction (no lane-axis concatenate). ---
        attn = jnp.sum(
            jnp.einsum('hsd,hdo->hso', ctx.astype(compute_dtype), wo_ref[...],
                       preferred_element_type=jnp.float32), axis=0) + bo

        h1 = x + attn                                   # residual 1 (f32)

        # --- layer_norm2 + MLP (gelu_pytorch_tanh) + residual 2 ---
        h2 = _layernorm(h1, ln2_g, ln2_b, eps)
        m = jnp.dot(h2.astype(compute_dtype), fc1_ref[...],
                    preferred_element_type=jnp.float32) + fc1_b
        m = _gelu_pytorch_tanh(m)
        m = jnp.dot(m.astype(compute_dtype), fc2_ref[...],
                    preferred_element_type=jnp.float32) + fc2_b

        o_ref[0] = (h1 + m).astype(o_ref.dtype)

    return kernel


# ------------------------------ host-side prep --------------------------------
def prepare_layer_operands(p):
    """Transpose weights to (in, out), fold the attention scale into the Q
    projection BEFORE the bf16 cast, pre-split Wo per head, cast weights to the
    MXU compute dtype, and pack the 10 bias / LayerNorm vectors (f32)."""
    scale = HEAD_DIM ** (-0.5)
    t = lambda w: jnp.asarray(w, jnp.float32).T        # torch (out,in) -> (in,out)

    def row(vec):
        vec = jnp.asarray(vec, jnp.float32)
        return jnp.pad(vec, (0, INTER - vec.shape[0]))[None, :]

    vecs = jnp.concatenate([
        row(p["ln1_g"]), row(p["ln1_b"]), row(p["ln2_g"]), row(p["ln2_b"]),
        row(p["bq"] * scale), row(p["bk"]), row(p["bv"]), row(p["bo"]),
        row(p["fc2_b"]), row(p["fc1_b"]),
    ], axis=0)

    return dict(
        wq=(t(p["wq"]) * scale).astype(COMPUTE_DTYPE),           # scale before cast
        wk=t(p["wk"]).astype(COMPUTE_DTYPE),
        wv=t(p["wv"]).astype(COMPUTE_DTYPE),
        wo=t(p["wo"]).reshape(HEADS, HEAD_DIM, HIDDEN).astype(COMPUTE_DTYPE),
        fc1=t(p["fc1_w"]).astype(COMPUTE_DTYPE),
        fc2=t(p["fc2_w"]).astype(COMPUTE_DTYPE),
        vecs=vecs,
    )


# --------------------------------- wrapper ------------------------------------
def encoder_layer_pallas(x, params):
    """Apply one SiglipEncoderLayer.  x: (B, S, D) float32."""
    B, S, D = x.shape
    ops = prepare_layer_operands(params)
    kernel = _make_layer_kernel(S, D, HEADS, HEAD_DIM, EPS, COMPUTE_DTYPE)
    resident2 = lambda b: (0, 0)          # same block every step -> fetched once
    resident3 = lambda b: (0, 0, 0)

    return pl.pallas_call(
        kernel,
        out_shape=jax.ShapeDtypeStruct((B, S, D), x.dtype),
        grid=(B,),
        in_specs=[
            pl.BlockSpec((1, S, D), lambda b: (b, 0, 0)),          # activations
            pl.BlockSpec((D, D), resident2),                       # wq (scaled)
            pl.BlockSpec((D, D), resident2),                       # wk
            pl.BlockSpec((D, D), resident2),                       # wv
            pl.BlockSpec((HEADS, HEAD_DIM, D), resident3),         # wo, per-head
            pl.BlockSpec((D, INTER), resident2),                   # fc1
            pl.BlockSpec((INTER, D), resident2),                   # fc2
            pl.BlockSpec((VEC_ROWS, INTER), resident2),            # packed biases/LN
        ],
        out_specs=pl.BlockSpec((1, S, D), lambda b: (b, 0, 0)),
        scratch_shapes=[
            pltpu.VMEM((HEADS, S, HEAD_DIM), COMPUTE_DTYPE),       # Q head-major
            pltpu.VMEM((HEADS, S, HEAD_DIM), COMPUTE_DTYPE),       # K head-major
            pltpu.VMEM((HEADS, S, HEAD_DIM), COMPUTE_DTYPE),       # V head-major
        ],
        compiler_params=pltpu.CompilerParams(
            # batch axis parallel -> both v7x TensorCores get work (no-op v5e/v6e)
            dimension_semantics=("parallel",),
            # TODO(synk): at prod shapes also raise vmem_limit_bytes and add a
            # trailing "arbitrary" axis streaming bf16 weight panels.
        ),
    )(x, ops["wq"], ops["wk"], ops["wv"], ops["wo"], ops["fc1"], ops["fc2"],
      ops["vecs"])


def siglip_encoder_pallas(inputs_embeds, layer_params, chain_layers=False):
    if chain_layers:
        # Standard (HuggingFace-style) behaviour: hidden_states = layer(hidden_states)
        h = inputs_embeds
        for p in layer_params:
            h = encoder_layer_pallas(h, p)
        return h
    # Faithful to the given reference: `hidden_states` is never reassigned in
    # the loop, so every layer consumes the ORIGINAL inputs_embeds and only the
    # last layer's output is returned; layers 0..N-2 are dead compute whose
    # outputs the module discards, so only the last layer's kernel is launched.
    return encoder_layer_pallas(inputs_embeds, layer_params[-1])


# -------------------- references (pure JAX, run on XLA) ------------------------
def encoder_layer_matched_ref(x, params):
    """Replicates the kernel math exactly (incl. bf16 MXU-operand casts)."""
    ops = prepare_layer_operands(params)
    cd = COMPUTE_DTYPE
    vecs, D = ops["vecs"], HIDDEN
    ln1_g, ln1_b = vecs[_LN1_G, :D], vecs[_LN1_B, :D]
    ln2_g, ln2_b = vecs[_LN2_G, :D], vecs[_LN2_B, :D]
    bq, bk, bv, bo = vecs[_BQ, :D], vecs[_BK, :D], vecs[_BV, :D], vecs[_BO, :D]
    fc2_b, fc1_b = vecs[_FC2_B, :D], vecs[_FC1_B, :]

    def one(xb):                                          # xb: (S, D)
        hn = _layernorm(xb, ln1_g, ln1_b, EPS)
        hc = hn.astype(cd)
        q = jnp.dot(hc, ops["wq"], preferred_element_type=jnp.float32) + bq
        k = jnp.dot(hc, ops["wk"], preferred_element_type=jnp.float32) + bk
        v = jnp.dot(hc, ops["wv"], preferred_element_type=jnp.float32) + bv
        split = lambda t: t.reshape(SEQ, HEADS, HEAD_DIM).transpose(1, 0, 2).astype(cd)
        qh, kh, vh = split(q), split(k), split(v)
        s = jnp.einsum('hqd,hkd->hqk', qh, kh, preferred_element_type=jnp.float32)
        s = s - jnp.max(s, axis=-1, keepdims=True)
        pr = jnp.exp(s)
        pr = pr / jnp.sum(pr, axis=-1, keepdims=True)
        ctx = jnp.einsum('hqk,hkd->hqd', pr.astype(cd), vh,
                         preferred_element_type=jnp.float32)
        attn = jnp.sum(jnp.einsum('hsd,hdo->hso', ctx.astype(cd), ops["wo"],
                                  preferred_element_type=jnp.float32), axis=0) + bo
        h1 = xb + attn
        h2 = _layernorm(h1, ln2_g, ln2_b, EPS)
        m = jnp.dot(h2.astype(cd), ops["fc1"], preferred_element_type=jnp.float32) + fc1_b
        m = _gelu_pytorch_tanh(m)
        m = jnp.dot(m.astype(cd), ops["fc2"], preferred_element_type=jnp.float32) + fc2_b
        return h1 + m

    return jnp.stack([one(x[b]) for b in range(x.shape[0])], axis=0)


def encoder_layer_f32_ref(x, p):
    """Full-f32 reference written directly from the PyTorch module math."""
    scale = HEAD_DIM ** (-0.5)
    h = _layernorm(x, p["ln1_g"], p["ln1_b"], EPS)
    q = h @ p["wq"].T + p["bq"]
    k = h @ p["wk"].T + p["bk"]
    v = h @ p["wv"].T + p["bv"]
    B, S, D = x.shape
    split = lambda t: t.reshape(B, S, HEADS, HEAD_DIM).transpose(0, 2, 1, 3)
    qh, kh, vh = split(q), split(k), split(v)
    s = jnp.einsum('bhqd,bhkd->bhqk', qh, kh) * scale
    a = jax.nn.softmax(s, axis=-1)
    ctx = jnp.einsum('bhqk,bhkd->bhqd', a, vh)
    ctx = ctx.transpose(0, 2, 1, 3).reshape(B, S, D)
    attn = ctx @ p["wo"].T + p["bo"]
    h1 = x + attn
    h2 = _layernorm(h1, p["ln2_g"], p["ln2_b"], EPS)
    m = _gelu_pytorch_tanh(h2 @ p["fc1_w"].T + p["fc1_b"])
    m = m @ p["fc2_w"].T + p["fc2_b"]
    return h1 + m


# ------------------------- deterministic parameter init -----------------------
def init_layer_params(key):
    ks = jax.random.split(key, 12)

    def lin(kw, kb, n_in, n_out):
        # PyTorch nn.Linear layout: weight (out, in), bias (out,)
        w = 0.02 * jax.random.normal(kw, (n_out, n_in), jnp.float32)
        b = 0.01 * jax.random.normal(kb, (n_out,), jnp.float32)
        return w, b

    wq, bq = lin(ks[0], ks[1], HIDDEN, HIDDEN)
    wk, bk = lin(ks[2], ks[3], HIDDEN, HIDDEN)
    wv, bv = lin(ks[4], ks[5], HIDDEN, HIDDEN)
    wo, bo = lin(ks[6], ks[7], HIDDEN, HIDDEN)
    fc1_w, fc1_b = lin(ks[8], ks[9], HIDDEN, INTER)
    fc2_w, fc2_b = lin(ks[10], ks[11], INTER, HIDDEN)
    return dict(
        wq=wq, bq=bq, wk=wk, bk=bk, wv=wv, bv=bv, wo=wo, bo=bo,
        fc1_w=fc1_w, fc1_b=fc1_b, fc2_w=fc2_w, fc2_b=fc2_b,
        ln1_g=jnp.full((HIDDEN,), 1.1, jnp.float32),
        ln1_b=jnp.full((HIDDEN,), 0.05, jnp.float32),
        ln2_g=jnp.full((HIDDEN,), 0.9, jnp.float32),
        ln2_b=jnp.full((HIDDEN,), -0.05, jnp.float32),
    )


# ----------------------------------- main --------------------------------------
if __name__ == "__main__":
    key = jax.random.PRNGKey(0)
    key_x, key_p = jax.random.split(key)
    inputs_embeds = jax.random.normal(key_x, (BATCH, SEQ, HIDDEN), jnp.float32)
    layer_params = [init_layer_params(k) for k in jax.random.split(key_p, NUM_LAYERS)]

    # --- default: semantics of the reference module as written (every layer
    #     reads inputs_embeds; only the last layer's output is returned) ---
    out = jax.block_until_ready(siglip_encoder_pallas(inputs_embeds, layer_params))
    assert out.shape == (BATCH, SEQ, HIDDEN)

    # tight check vs a pure-JAX replica of the exact kernel math (same bf16
    # MXU-operand casts); differences are only Mosaic-vs-XLA rounding.
    ref_matched = encoder_layer_matched_ref(inputs_embeds, layer_params[-1])
    assert jnp.allclose(out, ref_matched, atol=2e-3, rtol=2e-3), \
        "mismatch vs bf16-matched JAX reference"

    # module-fidelity check vs exact f32 PyTorch math; the gap is only the
    # bf16 MXU-operand quantization (well under this tolerance at these shapes).
    ref_f32 = encoder_layer_f32_ref(inputs_embeds, layer_params[-1])
    assert jnp.allclose(out, ref_f32, atol=2e-2, rtol=2e-2), \
        "mismatch vs f32 module reference"

    # --- chained mode (standard HF encoder behaviour), validated layer-by-layer ---
    out_chain = jax.block_until_ready(
        siglip_encoder_pallas(inputs_embeds, layer_params, chain_layers=True))
    ref_chain = inputs_embeds
    for p in layer_params:
        ref_chain = encoder_layer_matched_ref(ref_chain, p)
    assert jnp.allclose(out_chain, ref_chain, atol=4e-3, rtol=4e-3), \
        "mismatch vs chained JAX reference"

    print("KERNEL_OK")
</pallas_src>

<mosaic_0001>
module attributes {stable_mosaic.version = 11 : i64} {
  func.func @kernel(%arg0: i32, %arg1: memref<1x16x128xf32, #tpu.memory_space<vmem>>, %arg2: memref<128x128xbf16, #tpu.memory_space<vmem>>, %arg3: memref<128x128xbf16, #tpu.memory_space<vmem>>, %arg4: memref<128x128xbf16, #tpu.memory_space<vmem>>, %arg5: memref<4x32x128xbf16, #tpu.memory_space<vmem>>, %arg6: memref<128x256xbf16, #tpu.memory_space<vmem>>, %arg7: memref<256x128xbf16, #tpu.memory_space<vmem>>, %arg8: memref<10x256xf32, #tpu.memory_space<vmem>>, %arg9: memref<1x16x128xf32, #tpu.memory_space<vmem>>, %arg10: memref<4x16x32xbf16, #tpu.memory_space<vmem>>, %arg11: memref<4x16x32xbf16, #tpu.memory_space<vmem>>, %arg12: memref<4x16x32xbf16, #tpu.memory_space<vmem>>) attributes {dimension_semantics = [#tpu.dimension_semantics<parallel>], iteration_bounds = array<i64: 2>, scalar_prefetch = 0 : i64, scratch_operands = 3 : i64, tpu.core_type = #tpu.core_type<tc>, window_params = [{transform_indices = @transform_0, window_bounds = array<i64: 1, 16, 128>}, {pipeline_mode = #tpu.pipeline_mode<synchronous>, transform_indices = @transform_1, window_bounds = array<i64: 128, 128>}, {pipeline_mode = #tpu.pipeline_mode<synchronous>, transform_indices = @transform_2, window_bounds = array<i64: 128, 128>}, {pipeline_mode = #tpu.pipeline_mode<synchronous>, transform_indices = @transform_3, window_bounds = array<i64: 128, 128>}, {pipeline_mode = #tpu.pipeline_mode<synchronous>, transform_indices = @transform_4, window_bounds = array<i64: 4, 32, 128>}, {pipeline_mode = #tpu.pipeline_mode<synchronous>, transform_indices = @transform_5, window_bounds = array<i64: 128, 256>}, {pipeline_mode = #tpu.pipeline_mode<synchronous>, transform_indices = @transform_6, window_bounds = array<i64: 256, 128>}, {pipeline_mode = #tpu.pipeline_mode<synchronous>, transform_indices = @transform_7, window_bounds = array<i64: 10, 256>}, {transform_indices = @transform_8, window_bounds = array<i64: 1, 16, 128>}]} {
    %c0 = arith.constant 0 : index
    %c0_0 = arith.constant 0 : index
    %c0_1 = arith.constant 0 : index
    %0 = vector.load %arg1[%c0, %c0_0, %c0_1] : memref<1x16x128xf32, #tpu.memory_space<vmem>>, vector<1x16x128xf32>
    %1 = vector.shape_cast %0 : vector<1x16x128xf32> to vector<16x128xf32>
    %c0_2 = arith.constant 0 : index
    %c0_3 = arith.constant 0 : index
    %2 = vector.load %arg8[%c0_2, %c0_3] : memref<10x256xf32, #tpu.memory_space<vmem>>, vector<10x256xf32>
    %3 = vector.extract_strided_slice %2 {offsets = [0, 0], sizes = [1, 128], strides = [1, 1]} : vector<10x256xf32> to vector<1x128xf32>
    %4 = vector.extract_strided_slice %2 {offsets = [1, 0], sizes = [1, 128], strides = [1, 1]} : vector<10x256xf32> to vector<1x128xf32>
    %5 = vector.extract_strided_slice %2 {offsets = [2, 0], sizes = [1, 128], strides = [1, 1]} : vector<10x256xf32> to vector<1x128xf32>
    %6 = vector.extract_strided_slice %2 {offsets = [3, 0], sizes = [1, 128], strides = [1, 1]} : vector<10x256xf32> to vector<1x128xf32>
    %7 = vector.extract_strided_slice %2 {offsets = [4, 0], sizes = [1, 128], strides = [1, 1]} : vector<10x256xf32> to vector<1x128xf32>
    %8 = vector.extract_strided_slice %2 {offsets = [5, 0], sizes = [1, 128], strides = [1, 1]} : vector<10x256xf32> to vector<1x128xf32>
    %9 = vector.extract_strided_slice %2 {offsets = [6, 0], sizes = [1, 128], strides = [1, 1]} : vector<10x256xf32> to vector<1x128xf32>
    %10 = vector.extract_strided_slice %2 {offsets = [7, 0], sizes = [1, 128], strides = [1, 1]} : vector<10x256xf32> to vector<1x128xf32>
    %11 = vector.extract_strided_slice %2 {offsets = [8, 0], sizes = [1, 128], strides = [1, 1]} : vector<10x256xf32> to vector<1x128xf32>
    %12 = vector.extract_strided_slice %2 {offsets = [9, 0], sizes = [1, 256], strides = [1, 1]} : vector<10x256xf32> to vector<1x256xf32>
    %cst = arith.constant dense<0.000000e+00> : vector<16xf32>
    %13 = vector.multi_reduction <add>, %1, %cst [1] : vector<16x128xf32> to vector<16xf32>
    %14 = vector.shape_cast %13 : vector<16xf32> to vector<16x1xf32>
    %cst_4 = arith.constant 1.280000e+02 : f32
    %15 = vector.broadcast %cst_4 : f32 to vector<16x1xf32>
    %16 = arith.divf %14, %15 : vector<16x1xf32>
    %17 = vector.broadcast %16 : vector<16x1xf32> to vector<16x128xf32>
    %18 = arith.subf %1, %17 : vector<16x128xf32>
    %19 = vector.broadcast %16 : vector<16x1xf32> to vector<16x128xf32>
    %20 = arith.subf %1, %19 : vector<16x128xf32>
    %21 = arith.mulf %18, %20 : vector<16x128xf32>
    %cst_5 = arith.constant dense<0.000000e+00> : vector<16xf32>
    %22 = vector.multi_reduction <add>, %21, %cst_5 [1] : vector<16x128xf32> to vector<16xf32>
    %23 = vector.shape_cast %22 : vector<16xf32> to vector<16x1xf32>
    %cst_6 = arith.constant 1.280000e+02 : f32
    %24 = vector.broadcast %cst_6 : f32 to vector<16x1xf32>
    %25 = arith.divf %23, %24 : vector<16x1xf32>
    %26 = vector.broadcast %16 : vector<16x1xf32> to vector<16x128xf32>
    %27 = arith.subf %1, %26 : vector<16x128xf32>
    %cst_7 = arith.constant 9.99999997E-7 : f32
    %28 = vector.broadcast %cst_7 : f32 to vector<16x1xf32>
    %29 = arith.addf %25, %28 : vector<16x1xf32>
    %30 = math.rsqrt %29 : vector<16x1xf32>
    %31 = vector.broadcast %30 : vector<16x1xf32> to vector<16x128xf32>
    %32 = arith.mulf %27, %31 : vector<16x128xf32>
    %33 = vector.broadcast %3 : vector<1x128xf32> to vector<16x128xf32>
    %34 = arith.mulf %32, %33 : vector<16x128xf32>
    %35 = vector.broadcast %4 : vector<1x128xf32> to vector<16x128xf32>
    %36 = arith.addf %34, %35 : vector<16x128xf32>
    %37 = arith.truncf %36 : vector<16x128xf32> to vector<16x128xbf16>
    %c0_8 = arith.constant 0 : index
    %c0_9 = arith.constant 0 : index
    %38 = vector.load %arg2[%c0_8, %c0_9] : memref<128x128xbf16, #tpu.memory_space<vmem>>, vector<128x128xbf16>
    %cst_10 = arith.constant dense<0.000000e+00> : vector<16x128xf32>
    %39 = tpu.matmul %37, %38, %cst_10 {dimension_numbers = #tpu.dot_dimension_numbers<[1], [0], [0], [1], [0, 0, 1, 1], [], []>} : vector<16x128xbf16>, vector<128x128xbf16>, vector<16x128xf32> -> vector<16x128xf32>
    %40 = vector.broadcast %7 : vector<1x128xf32> to vector<16x128xf32>
    %41 = arith.addf %39, %40 : vector<16x128xf32>
    %c0_11 = arith.constant 0 : index
    %c0_12 = arith.constant 0 : index
    %42 = vector.load %arg3[%c0_11, %c0_12] : memref<128x128xbf16, #tpu.memory_space<vmem>>, vector<128x128xbf16>
    %cst_13 = arith.constant dense<0.000000e+00> : vector<16x128xf32>
    %43 = tpu.matmul %37, %42, %cst_13 {dimension_numbers = #tpu.dot_dimension_numbers<[1], [0], [0], [1], [0, 0, 1, 1], [], []>} : vector<16x128xbf16>, vector<128x128xbf16>, vector<16x128xf32> -> vector<16x128xf32>
    %44 = vector.broadcast %8 : vector<1x128xf32> to vector<16x128xf32>
    %45 = arith.addf %43, %44 : vector<16x128xf32>
    %c0_14 = arith.constant 0 : index
    %c0_15 = arith.constant 0 : index
    %46 = vector.load %arg4[%c0_14, %c0_15] : memref<128x128xbf16, #tpu.memory_space<vmem>>, vector<128x128xbf16>
    %cst_16 = arith.constant dense<0.000000e+00> : vector<16x128xf32>
    %47 = tpu.matmul %37, %46, %cst_16 {dimension_numbers = #tpu.dot_dimension_numbers<[1], [0], [0], [1], [0, 0, 1, 1], [], []>} : vector<16x128xbf16>, vector<128x128xbf16>, vector<16x128xf32> -> vector<16x128xf32>
    %48 = vector.broadcast %9 : vector<1x128xf32> to vector<16x128xf32>
    %49 = arith.addf %47, %48 : vector<16x128xf32>
    %50 = vector.extract_strided_slice %41 {offsets = [0, 0], sizes = [16, 32], strides = [1, 1]} : vector<16x128xf32> to vector<16x32xf32>
    %51 = arith.truncf %50 : vector<16x32xf32> to vector<16x32xbf16>
    %c0_17 = arith.constant 0 : index
    %c0_18 = arith.constant 0 : index
    %c0_19 = arith.constant 0 : index
    %52 = vector.load %arg10[%c0_17, %c0_18, %c0_19] : memref<4x16x32xbf16, #tpu.memory_space<vmem>>, vector<1x16x32xbf16>
    %53 = vector.shape_cast %52 : vector<1x16x32xbf16> to vector<16x32xbf16>
    %54 = vector.shape_cast %51 : vector<16x32xbf16> to vector<1x16x32xbf16>
    tpu.vector_store %arg10[%c0_17, %c0_18, %c0_19], %54 {strides = array<i32>} : memref<4x16x32xbf16, #tpu.memory_space<vmem>>, vector<1x16x32xbf16>,
    %55 = vector.extract_strided_slice %45 {offsets = [0, 0], sizes = [16, 32], strides = [1, 1]} : vector<16x128xf32> to vector<16x32xf32>
    %56 = arith.truncf %55 : vector<16x32xf32> to vector<16x32xbf16>
    %c0_20 = arith.constant 0 : index
    %c0_21 = arith.constant 0 : index
    %c0_22 = arith.constant 0 : index
    %57 = vector.load %arg11[%c0_20, %c0_21, %c0_22] : memref<4x16x32xbf16, #tpu.memory_space<vmem>>, vector<1x16x32xbf16>
    %58 = vector.shape_cast %57 : vector<1x16x32xbf16> to vector<16x32xbf16>
    %59 = vector.shape_cast %56 : vector<16x32xbf16> to vector<1x16x32xbf16>
    tpu.vector_store %arg11[%c0_20, %c0_21, %c0_22], %59 {strides = array<i32>} : memref<4x16x32xbf16, #tpu.memory_space<vmem>>, vector<1x16x32xbf16>,
    %60 = vector.extract_strided_slice %49 {offsets = [0, 0], sizes = [16, 32], strides = [1, 1]} : vector<16x128xf32> to vector<16x32xf32>
    %61 = arith.truncf %60 : vector<16x32xf32> to vector<16x32xbf16>
    %c0_23 = arith.constant 0 : index
    %c0_24 = arith.constant 0 : index
    %c0_25 = arith.constant 0 : index
    %62 = vector.load %arg12[%c0_23, %c0_24, %c0_25] : memref<4x16x32xbf16, #tpu.memory_space<vmem>>, vector<1x16x32xbf16>
    %63 = vector.shape_cast %62 : vector<1x16x32xbf16> to vector<16x32xbf16>
    %64 = vector.shape_cast %61 : vector<16x32xbf16> to vector<1x16x32xbf16>
    tpu.vector_store %arg12[%c0_23, %c0_24, %c0_25], %64 {strides = array<i32>} : memref<4x16x32xbf16, #tpu.memory_space<vmem>>, vector<1x16x32xbf16>,
    %65 = vector.extract_strided_slice %41 {offsets = [0, 32], sizes = [16, 32], strides = [1, 1]} : vector<16x128xf32> to vector<16x32xf32>
    %66 = arith.truncf %65 : vector<16x32xf32> to vector<16x32xbf16>
    %c1 = arith.constant 1 : index
    %c0_26 = arith.constant 0 : index
    %c0_27 = arith.constant 0 : index
    %67 = vector.load %arg10[%c1, %c0_26, %c0_27] : memref<4x16x32xbf16, #tpu.memory_space<vmem>>, vector<1x16x32xbf16>
    %68 = vector.shape_cast %67 : vector<1x16x32xbf16> to vector<16x32xbf16>
    %69 = vector.shape_cast %66 : vector<16x32xbf16> to vector<1x16x32xbf16>
    tpu.vector_store %arg10[%c1, %c0_26, %c0_27], %69 {strides = array<i32>} : memref<4x16x32xbf16, #tpu.memory_space<vmem>>, vector<1x16x32xbf16>,
    %70 = vector.extract_strided_slice %45 {offsets = [0, 32], sizes = [16, 32], strides = [1, 1]} : vector<16x128xf32> to vector<16x32xf32>
    %71 = arith.truncf %70 : vector<16x32xf32> to vector<16x32xbf16>
    %c1_28 = arith.constant 1 : index
    %c0_29 = arith.constant 0 : index
    %c0_30 = arith.constant 0 : index
    %72 = vector.load %arg11[%c1_28, %c0_29, %c0_30] : memref<4x16x32xbf16, #tpu.memory_space<vmem>>, vector<1x16x32xbf16>
    %73 = vector.shape_cast %72 : vector<1x16x32xbf16> to vector<16x32xbf16>
    %74 = vector.shape_cast %71 : vector<16x32xbf16> to vector<1x16x32xbf16>
    tpu.vector_store %arg11[%c1_28, %c0_29, %c0_30], %74 {strides = array<i32>} : memref<4x16x32xbf16, #tpu.memory_space<vmem>>, vector<1x16x32xbf16>,
    %75 = vector.extract_strided_slice %49 {offsets = [0, 32], sizes = [16, 32], strides = [1, 1]} : vector<16x128xf32> to vector<16x32xf32>
    %76 = arith.truncf %75 : vector<16x32xf32> to vector<16x32xbf16>
    %c1_31 = arith.constant 1 : index
    %c0_32 = arith.constant 0 : index
    %c0_33 = arith.constant 0 : index
    %77 = vector.load %arg12[%c1_31, %c0_32, %c0_33] : memref<4x16x32xbf16, #tpu.memory_space<vmem>>, vector<1x16x32xbf16>
    %78 = vector.shape_cast %77 : vector<1x16x32xbf16> to vector<16x32xbf16>
    %79 = vector.shape_cast %76 : vector<16x32xbf16> to vector<1x16x32xbf16>
    tpu.vector_store %arg12[%c1_31, %c0_32, %c0_33], %79 {strides = array<i32>} : memref<4x16x32xbf16, #tpu.memory_space<vmem>>, vector<1x16x32xbf16>,
    %80 = vector.extract_strided_slice %41 {offsets = [0, 64], sizes = [16, 32], strides = [1, 1]} : vector<16x128xf32> to vector<16x32xf32>
    %81 = arith.truncf %80 : vector<16x32xf32> to vector<16x32xbf16>
    %c2 = arith.constant 2 : index
    %c0_34 = arith.constant 0 : index
    %c0_35 = arith.constant 0 : index
    %82 = vector.load %arg10[%c2, %c0_34, %c0_35] : memref<4x16x32xbf16, #tpu.memory_space<vmem>>, vector<1x16x32xbf16>
    %83 = vector.shape_cast %82 : vector<1x16x32xbf16> to vector<16x32xbf16>
    %84 = vector.shape_cast %81 : vector<16x32xbf16> to vector<1x16x32xbf16>
    tpu.vector_store %arg10[%c2, %c0_34, %c0_35], %84 {strides = array<i32>} : memref<4x16x32xbf16, #tpu.memory_space<vmem>>, vector<1x16x32xbf16>,
    %85 = vector.extract_strided_slice %45 {offsets = [0, 64], sizes = [16, 32], strides = [1, 1]} : vector<16x128xf32> to vector<16x32xf32>
    %86 = arith.truncf %85 : vector<16x32xf32> to vector<16x32xbf16>
    %c2_36 = arith.constant 2 : index
    %c0_37 = arith.constant 0 : index
    %c0_38 = arith.constant 0 : index
    %87 = vector.load %arg11[%c2_36, %c0_37, %c0_38] : memref<4x16x32xbf16, #tpu.memory_space<vmem>>, vector<1x16x32xbf16>
    %88 = vector.shape_cast %87 : vector<1x16x32xbf16> to vector<16x32xbf16>
    %89 = vector.shape_cast %86 : vector<16x32xbf16> to vector<1x16x32xbf16>
    tpu.vector_store %arg11[%c2_36, %c0_37, %c0_38], %89 {strides = array<i32>} : memref<4x16x32xbf16, #tpu.memory_space<vmem>>, vector<1x16x32xbf16>,
    %90 = vector.extract_strided_slice %49 {offsets = [0, 64], sizes = [16, 32], strides = [1, 1]} : vector<16x128xf32> to vector<16x32xf32>
    %91 = arith.truncf %90 : vector<16x32xf32> to vector<16x32xbf16>
    %c2_39 = arith.constant 2 : index
    %c0_40 = arith.constant 0 : index
    %c0_41 = arith.constant 0 : index
    %92 = vector.load %arg12[%c2_39, %c0_40, %c0_41] : memref<4x16x32xbf16, #tpu.memory_space<vmem>>, vector<1x16x32xbf16>
    %93 = vector.shape_cast %92 : vector<1x16x32xbf16> to vector<16x32xbf16>
    %94 = vector.shape_cast %91 : vector<16x32xbf16> to vector<1x16x32xbf16>
    tpu.vector_store %arg12[%c2_39, %c0_40, %c0_41], %94 {strides = array<i32>} : memref<4x16x32xbf16, #tpu.memory_space<vmem>>, vector<1x16x32xbf16>,
    %95 = vector.extract_strided_slice %41 {offsets = [0, 96], sizes = [16, 32], strides = [1, 1]} : vector<16x128xf32> to vector<16x32xf32>
    %96 = arith.truncf %95 : vector<16x32xf32> to vector<16x32xbf16>
    %c3 = arith.constant 3 : index
    %c0_42 = arith.constant 0 : index
    %c0_43 = arith.constant 0 : index
    %97 = vector.load %arg10[%c3, %c0_42, %c0_43] : memref<4x16x32xbf16, #tpu.memory_space<vmem>>, vector<1x16x32xbf16>
    %98 = vector.shape_cast %97 : vector<1x16x32xbf16> to vector<16x32xbf16>
    %99 = vector.shape_cast %96 : vector<16x32xbf16> to vector<1x16x32xbf16>
    tpu.vector_store %arg10[%c3, %c0_42, %c0_43], %99 {strides = array<i32>} : memref<4x16x32xbf16, #tpu.memory_space<vmem>>, vector<1x16x32xbf16>,
    %100 = vector.extract_strided_slice %45 {offsets = [0, 96], sizes = [16, 32], strides = [1, 1]} : vector<16x128xf32> to vector<16x32xf32>
    %101 = arith.truncf %100 : vector<16x32xf32> to vector<16x32xbf16>
    %c3_44 = arith.constant 3 : index
    %c0_45 = arith.constant 0 : index
    %c0_46 = arith.constant 0 : index
    %102 = vector.load %arg11[%c3_44, %c0_45, %c0_46] : memref<4x16x32xbf16, #tpu.memory_space<vmem>>, vector<1x16x32xbf16>
    %103 = vector.shape_cast %102 : vector<1x16x32xbf16> to vector<16x32xbf16>
    %104 = vector.shape_cast %101 : vector<16x32xbf16> to vector<1x16x32xbf16>
    tpu.vector_store %arg11[%c3_44, %c0_45, %c0_46], %104 {strides = array<i32>} : memref<4x16x32xbf16, #tpu.memory_space<vmem>>, vector<1x16x32xbf16>,
    %105 = vector.extract_strided_slice %49 {offsets = [0, 96], sizes = [16, 32], strides = [1, 1]} : vector<16x128xf32> to vector<16x32xf32>
    %106 = arith.truncf %105 : vector<16x32xf32> to vector<16x32xbf16>
    %c3_47 = arith.constant 3 : index
    %c0_48 = arith.constant 0 : index
    %c0_49 = arith.constant 0 : index
    %107 = vector.load %arg12[%c3_47, %c0_48, %c0_49] : memref<4x16x32xbf16, #tpu.memory_space<vmem>>, vector<1x16x32xbf16>
    %108 = vector.shape_cast %107 : vector<1x16x32xbf16> to vector<16x32xbf16>
    %109 = vector.shape_cast %106 : vector<16x32xbf16> to vector<1x16x32xbf16>
    tpu.vector_store %arg12[%c3_47, %c0_48, %c0_49], %109 {strides = array<i32>} : memref<4x16x32xbf16, #tpu.memory_space<vmem>>, vector<1x16x32xbf16>,
    %c0_50 = arith.constant 0 : index
    %c0_51 = arith.constant 0 : index
    %c0_52 = arith.constant 0 : index
    %110 = vector.load %arg10[%c0_50, %c0_51, %c0_52] : memref<4x16x32xbf16, #tpu.memory_space<vmem>>, vector<4x16x32xbf16>
    %c0_53 = arith.constant 0 : index
    %c0_54 = arith.constant 0 : index
    %c0_55 = arith.constant 0 : index
    %111 = vector.load %arg11[%c0_53, %c0_54, %c0_55] : memref<4x16x32xbf16, #tpu.memory_space<vmem>>, vector<4x16x32xbf16>
    %c0_56 = arith.constant 0 : index
    %c0_57 = arith.constant 0 : index
    %c0_58 = arith.constant 0 : index
    %112 = vector.load %arg12[%c0_56, %c0_57, %c0_58] : memref<4x16x32xbf16, #tpu.memory_space<vmem>>, vector<4x16x32xbf16>
    "tpu.trace_start"() <{level = 10 : i32, message = "hqd,hkd->hqk"}> : () -> ()
    %cst_59 = arith.constant dense<0.000000e+00> : vector<4x16x16xf32>
    %113 = tpu.matmul %110, %111, %cst_59 {dimension_numbers = #tpu.dot_dimension_numbers<[2], [2], [1], [1], [0, 0, 0, 1, 1, 1], [0], [0]>} : vector<4x16x32xbf16>, vector<4x16x32xbf16>, vector<4x16x16xf32> -> vector<4x16x16xf32>
    "tpu.trace_stop"() : () -> ()
    %cst_60 = arith.constant dense<0xFF800000> : vector<4x16xf32>
    %114 = vector.multi_reduction <maximumf>, %113, %cst_60 [2] : vector<4x16x16xf32> to vector<4x16xf32>
    %115 = vector.shape_cast %114 : vector<4x16xf32> to vector<4x16x1xf32>
    %116 = vector.broadcast %115 : vector<4x16x1xf32> to vector<4x16x16xf32>
    %117 = arith.subf %113, %116 : vector<4x16x16xf32>
    %118 = math.exp %117 : vector<4x16x16xf32>
    %cst_61 = arith.constant dense<0.000000e+00> : vector<4x16xf32>
    %119 = vector.multi_reduction <add>, %118, %cst_61 [2] : vector<4x16x16xf32> to vector<4x16xf32>
    %120 = vector.shape_cast %119 : vector<4x16xf32> to vector<4x16x1xf32>
    %121 = vector.broadcast %120 : vector<4x16x1xf32> to vector<4x16x16xf32>
    %122 = arith.divf %118, %121 : vector<4x16x16xf32>
    %123 = arith.truncf %122 : vector<4x16x16xf32> to vector<4x16x16xbf16>
    "tpu.trace_start"() <{level = 10 : i32, message = "hqk,hkd->hqd"}> : () -> ()
    %cst_62 = arith.constant dense<0.000000e+00> : vector<4x16x32xf32>
    %124 = tpu.matmul %123, %112, %cst_62 {dimension_numbers = #tpu.dot_dimension_numbers<[2], [1], [1], [2], [0, 0, 0, 1, 1, 2], [0], [0]>} : vector<4x16x16xbf16>, vector<4x16x32xbf16>, vector<4x16x32xf32> -> vector<4x16x32xf32>
    "tpu.trace_stop"() : () -> ()
    %125 = arith.truncf %124 : vector<4x16x32xf32> to vector<4x16x32xbf16>
    %c0_63 = arith.constant 0 : index
    %c0_64 = arith.constant 0 : index
    %c0_65 = arith.constant 0 : index
    %126 = vector.load %arg5[%c0_63, %c0_64, %c0_65] : memref<4x32x128xbf16, #tpu.memory_space<vmem>>, vector<4x32x128xbf16>
    "tpu.trace_start"() <{level = 10 : i32, message = "hsd,hdo->hso"}> : () -> ()
    %cst_66 = arith.constant dense<0.000000e+00> : vector<4x16x128xf32>
    %127 = tpu.matmul %125, %126, %cst_66 {dimension_numbers = #tpu.dot_dimension_numbers<[2], [1], [1], [2], [0, 0, 0, 1, 1, 2], [0], [0]>} : vector<4x16x32xbf16>, vector<4x32x128xbf16>, vector<4x16x128xf32> -> vector<4x16x128xf32>
    "tpu.trace_stop"() : () -> ()
    %cst_67 = arith.constant dense<0.000000e+00> : vector<16x128xf32>
    %128 = vector.multi_reduction <add>, %127, %cst_67 [0] : vector<4x16x128xf32> to vector<16x128xf32>
    %129 = vector.broadcast %10 : vector<1x128xf32> to vector<16x128xf32>
    %130 = arith.addf %128, %129 : vector<16x128xf32>
    %131 = arith.addf %1, %130 : vector<16x128xf32>
    %cst_68 = arith.constant dense<0.000000e+00> : vector<16xf32>
    %132 = vector.multi_reduction <add>, %131, %cst_68 [1] : vector<16x128xf32> to vector<16xf32>
    %133 = vector.shape_cast %132 : vector<16xf32> to vector<16x1xf32>
    %cst_69 = arith.constant 1.280000e+02 : f32
    %134 = vector.broadcast %cst_69 : f32 to vector<16x1xf32>
    %135 = arith.divf %133, %134 : vector<16x1xf32>
    %136 = vector.broadcast %135 : vector<16x1xf32> to vector<16x128xf32>
    %137 = arith.subf %131, %136 : vector<16x128xf32>
    %138 = vector.broadcast %135 : vector<16x1xf32> to vector<16x128xf32>
    %139 = arith.subf %131, %138 : vector<16x128xf32>
    %140 = arith.mulf %137, %139 : vector<16x128xf32>
    %cst_70 = arith.constant dense<0.000000e+00> : vector<16xf32>
    %141 = vector.multi_reduction <add>, %140, %cst_70 [1] : vector<16x128xf32> to vector<16xf32>
    %142 = vector.shape_cast %141 : vector<16xf32> to vector<16x1xf32>
    %cst_71 = arith.constant 1.280000e+02 : f32
    %143 = vector.broadcast %cst_71 : f32 to vector<16x1xf32>
    %144 = arith.divf %142, %143 : vector<16x1xf32>
    %145 = vector.broadcast %135 : vector<16x1xf32> to vector<16x128xf32>
    %146 = arith.subf %131, %145 : vector<16x128xf32>
    %cst_72 = arith.constant 9.99999997E-7 : f32
    %147 = vector.broadcast %cst_72 : f32 to vector<16x1xf32>
    %148 = arith.addf %144, %147 : vector<16x1xf32>
    %149 = math.rsqrt %148 : vector<16x1xf32>
    %150 = vector.broadcast %149 : vector<16x1xf32> to vector<16x128xf32>
    %151 = arith.mulf %146, %150 : vector<16x128xf32>
    %152 = vector.broadcast %5 : vector<1x128xf32> to vector<16x128xf32>
    %153 = arith.mulf %151, %152 : vector<16x128xf32>
    %154 = vector.broadcast %6 : vector<1x128xf32> to vector<16x128xf32>
    %155 = arith.addf %153, %154 : vector<16x128xf32>
    %156 = arith.truncf %155 : vector<16x128xf32> to vector<16x128xbf16>
    %c0_73 = arith.constant 0 : index
    %c0_74 = arith.constant 0 : index
    %157 = vector.load %arg6[%c0_73, %c0_74] : memref<128x256xbf16, #tpu.memory_space<vmem>>, vector<128x256xbf16>
    %cst_75 = arith.constant dense<0.000000e+00> : vector<16x256xf32>
    %158 = tpu.matmul %156, %157, %cst_75 {dimension_numbers = #tpu.dot_dimension_numbers<[1], [0], [0], [1], [0, 0, 1, 1], [], []>} : vector<16x128xbf16>, vector<128x256xbf16>, vector<16x256xf32> -> vector<16x256xf32>
    %159 = vector.broadcast %12 : vector<1x256xf32> to vector<16x256xf32>
    %160 = arith.addf %158, %159 : vector<16x256xf32>
    %cst_76 = arith.constant 5.000000e-01 : f32
    %161 = vector.broadcast %cst_76 : f32 to vector<16x256xf32>
    %162 = arith.mulf %161, %160 : vector<16x256xf32>
    %cst_77 = arith.constant 4.471500e-02 : f32
    %163 = vector.broadcast %cst_77 : f32 to vector<16x256xf32>
    %164 = arith.mulf %163, %160 : vector<16x256xf32>
    %165 = arith.mulf %164, %160 : vector<16x256xf32>
    %166 = arith.mulf %165, %160 : vector<16x256xf32>
    %167 = arith.addf %160, %166 : vector<16x256xf32>
    %cst_78 = arith.constant 0.797884583 : f32
    %168 = vector.broadcast %cst_78 : f32 to vector<16x256xf32>
    %169 = arith.mulf %168, %167 : vector<16x256xf32>
    %170 = math.tanh %169 : vector<16x256xf32>
    %cst_79 = arith.constant 1.000000e+00 : f32
    %171 = vector.broadcast %cst_79 : f32 to vector<16x256xf32>
    %172 = arith.addf %171, %170 : vector<16x256xf32>
    %173 = arith.mulf %162, %172 : vector<16x256xf32>
    %174 = arith.truncf %173 : vector<16x256xf32> to vector<16x256xbf16>
    %c0_80 = arith.constant 0 : index
    %c0_81 = arith.constant 0 : index
    %175 = vector.load %arg7[%c0_80, %c0_81] : memref<256x128xbf16, #tpu.memory_space<vmem>>, vector<256x128xbf16>
    %cst_82 = arith.constant dense<0.000000e+00> : vector<16x128xf32>
    %176 = tpu.matmul %174, %175, %cst_82 {dimension_numbers = #tpu.dot_dimension_numbers<[1], [0], [0], [1], [0, 0, 1, 1], [], []>} : vector<16x256xbf16>, vector<256x128xbf16>, vector<16x128xf32> -> vector<16x128xf32>
    %177 = vector.broadcast %11 : vector<1x128xf32> to vector<16x128xf32>
    %178 = arith.addf %176, %177 : vector<16x128xf32>
    %179 = arith.addf %131, %178 : vector<16x128xf32>
    %c0_83 = arith.constant 0 : index
    %c0_84 = arith.constant 0 : index
    %c0_85 = arith.constant 0 : index
    %180 = vector.load %arg9[%c0_83, %c0_84, %c0_85] : memref<1x16x128xf32, #tpu.memory_space<vmem>>, vector<1x16x128xf32>
    %181 = vector.shape_cast %180 : vector<1x16x128xf32> to vector<16x128xf32>
    %182 = vector.shape_cast %179 : vector<16x128xf32> to vector<1x16x128xf32>
    tpu.vector_store %arg9[%c0_83, %c0_84, %c0_85], %182 {strides = array<i32>} : memref<1x16x128xf32, #tpu.memory_space<vmem>>, vector<1x16x128xf32>,
    return
  }
  func.func @transform_0(%arg0: i32) -> (i32, i32, i32) {
    %c0_i32 = arith.constant 0 : i32
    %c0_i32_0 = arith.constant 0 : i32
    %c0_i32_1 = arith.constant 0 : i32
    return %arg0, %c0_i32, %c0_i32_0 : i32, i32, i32
  }
  func.func @transform_1(%arg0: i32) -> (i32, i32) {
    %c0_i32 = arith.constant 0 : i32
    %c0_i32_0 = arith.constant 0 : i32
    %c0_i32_1 = arith.constant 0 : i32
    return %c0_i32, %c0_i32_0 : i32, i32
  }
  func.func @transform_2(%arg0: i32) -> (i32, i32) {
    %c0_i32 = arith.constant 0 : i32
    %c0_i32_0 = arith.constant 0 : i32
    %c0_i32_1 = arith.constant 0 : i32
    return %c0_i32, %c0_i32_0 : i32, i32
  }
  func.func @transform_3(%arg0: i32) -> (i32, i32) {
    %c0_i32 = arith.constant 0 : i32
    %c0_i32_0 = arith.constant 0 : i32
    %c0_i32_1 = arith.constant 0 : i32
    return %c0_i32, %c0_i32_0 : i32, i32
  }
  func.func @transform_4(%arg0: i32) -> (i32, i32, i32) {
    %c0_i32 = arith.constant 0 : i32
    %c0_i32_0 = arith.constant 0 : i32
    %c0_i32_1 = arith.constant 0 : i32
    %c0_i32_2 = arith.constant 0 : i32
    return %c0_i32, %c0_i32_0, %c0_i32_1 : i32, i32, i32
  }
  func.func @transform_5(%arg0: i32) -> (i32, i32) {
    %c0_i32 = arith.constant 0 : i32
    %c0_i32_0 = arith.constant 0 : i32
    %c0_i32_1 = arith.constant 0 : i32
    return %c0_i32, %c0_i32_0 : i32, i32
  }
  func.func @transform_6(%arg0: i32) -> (i32, i32) {
    %c0_i32 = arith.constant 0 : i32
    %c0_i32_0 = arith.constant 0 : i32
    %c0_i32_1 = arith.constant 0 : i32
    return %c0_i32, %c0_i32_0 : i32, i32
  }
  func.func @transform_7(%arg0: i32) -> (i32, i32) {
    %c0_i32 = arith.constant 0 : i32
    %c0_i32_0 = arith.constant 0 : i32
    %c0_i32_1 = arith.constant 0 : i32
    return %c0_i32, %c0_i32_0 : i32, i32
  }
  func.func @transform_8(%arg0: i32) -> (i32, i32, i32) {
    %c0_i32 = arith.constant 0 : i32
    %c0_i32_0 = arith.constant 0 : i32
    %c0_i32_1 = arith.constant 0 : i32
    return %arg0, %c0_i32, %c0_i32_0 : i32, i32, i32
  }
}

</mosaic_0001>

<llo_original>
// kernel: tpu_custom_call.1
$region0: #{tpu_custom_call.1}
  #allocation0 [shape = 'u32[]', space=smem, size = 0x4, offset = 0x4, fixed_abs, tag = 'smem constant byte address 0x4 - core index']
  #allocation1 [shape = 'u32[144,128]{1,0:T(1,128)}', space=vmem, size = 0x12000, scoped, tag = 'internal scratch']
  #allocation2 [shape = 'bf16[4,16,32]{2,1,0:T(16,128)(2,1)}', space=vmem, size = 0x4000, scoped, tag = 'scratch operand']
  #allocation3 [shape = 'bf16[4,16,32]{2,1,0:T(16,128)(2,1)}', space=vmem, size = 0x4000, scoped, tag = 'scratch operand']
  #allocation4 [shape = 'bf16[4,16,32]{2,1,0:T(16,128)(2,1)}', space=vmem, size = 0x4000, scoped, tag = 'scratch operand']
  %s0 = inlined_call_operand.hbm [shape: f32[2,16,128], index: 0, kind: input, shape index: {}]
  %s1 = inlined_call_operand.hbm [shape: bf16[128,128], index: 1, kind: input, shape index: {}]
  %s2 = inlined_call_operand.hbm [shape: bf16[128,128], index: 2, kind: input, shape index: {}]
  %s3 = inlined_call_operand.hbm [shape: bf16[128,128], index: 3, kind: input, shape index: {}]
  %s4 = inlined_call_operand.hbm [shape: bf16[4,32,128], index: 4, kind: input, shape index: {}]
  %s5 = inlined_call_operand.hbm [shape: bf16[128,256], index: 5, kind: input, shape index: {}]
  %s6 = inlined_call_operand.hbm [shape: bf16[256,128], index: 6, kind: input, shape index: {}]
  %s7 = inlined_call_operand.hbm [shape: f32[10,256], index: 7, kind: input, shape index: {}]
  %s8 = inlined_call_operand.hbm [shape: f32[2,16,128], index: 8, kind: output, shape index: {}]
  %s9 = sld [smem:[#allocation0]]
  $region97: #{tpu_custom_call.1} parent=0
    _
  %s11 = ssub.s32 1, %s9
  %s12 = scalar_select 0, %s11, %s9
  $region1: #{tpu_custom_call.1} parent=0
    #allocation5 [shape = 'u8[16384]{0}', space=vmem, size = 0x4000, scoped, tag = 'input window, operand 0']
    #allocation6 [shape = 's32[2]{0}', space=sflag, size = 0x8, scoped, tag = 'scoped memory for tpu_custom_call.1']
    #allocation7 [shape = 's32[2]{0}', space=sflag, size = 0x8, scoped, tag = 'scoped memory for tpu_custom_call.1']
    #allocation8 [shape = 'u8[32768]{0}', space=vmem, size = 0x8000, scoped, tag = 'input window, operand 1, single buffered']
    #allocation9 [shape = 's32[1]{0}', space=sflag, size = 0x4, scoped, tag = 'scoped memory for tpu_custom_call.1']
    #allocation10 [shape = 'u8[32768]{0}', space=vmem, size = 0x8000, scoped, tag = 'input window, operand 2, single buffered']
    #allocation11 [shape = 'u8[32768]{0}', space=vmem, size = 0x8000, scoped, tag = 'input window, operand 3, single buffered']
    #allocation12 [shape = 's32[1]{0}', space=sflag, size = 0x4, scoped, tag = 'scoped memory for tpu_custom_call.1']
    #allocation13 [shape = 'u8[32768]{0}', space=vmem, size = 0x8000, scoped, tag = 'input window, operand 4, single buffered']
    #allocation14 [shape = 'u8[65536]{0}', space=vmem, size = 0x10000, scoped, tag = 'input window, operand 5, single buffered']
    #allocation15 [shape = 's32[1]{0}', space=sflag, size = 0x4, scoped, tag = 'scoped memory for tpu_custom_call.1']
    #allocation16 [shape = 'u8[65536]{0}', space=vmem, size = 0x10000, scoped, tag = 'input window, operand 6, single buffered']
    #allocation17 [shape = 'u8[16384]{0}', space=vmem, size = 0x4000, scoped, tag = 'input window, operand 7, single buffered']
    #allocation18 [shape = 's32[1]{0}', space=sflag, size = 0x4, scoped, tag = 'scoped memory for tpu_custom_call.1']
    #allocation19 [shape = 'u8[16384]{0}', space=vmem, size = 0x4000, scoped, tag = 'output window, operand 0']
    %13 = vsyncpa [#allocation6], 0
    %s14 = scalar_lea.sflag [#allocation6], 1
    %15 = vsyncpa %s14, 0
    %16 = vsyncpa [#allocation9], 0
    %17 = vsyncpa [#allocation12], 0
    %18 = vsyncpa [#allocation15], 0
    %19 = vsyncpa [#allocation18], 0
    %20 = vsyncpa [#allocation7], 0
    %s21 = scalar_lea.sflag [#allocation7], 1
    %22 = vsyncpa %s21, 0
    loop: start=0, step=1, limit=4
    $region2: #{tpu_custom_call.1} parent=1 // loop_pre_header
      _
    $region3: #{tpu_custom_call.1} parent=1 // loop_header
      %s24 = sphi 0, %s28
      %p25 = scmp.ge.s32.totalorder %s24, 4
      %s34 = sphi 0, %s36
      %s37 = sphi 0, %s34
      %s38 = sphi 0, %s37
      %s54 = sphi 0, %s38
      %s58 = sphi 0, %s58
      %s60 = sphi 0, %s58
      %s61 = sphi 0, %s60
      %s75 = sphi 0, %s61
      %s79 = sphi 0, %s79
      %s81 = sphi 0, %s79
      %s82 = sphi 0, %s81
      %s96 = sphi 0, %s82
      %s100 = sphi 0, %s100
      %s102 = sphi 0, %s100
      %s103 = sphi 0, %s102
      %s117 = sphi 0, %s103
      %s121 = sphi 0, %s121
      %s123 = sphi 0, %s121
      %s124 = sphi 0, %s123
      %s138 = sphi 0, %s124
      %s142 = sphi 0, %s142
      %s144 = sphi 0, %s142
      %s145 = sphi 0, %s144
      %s159 = sphi 0, %s145
      %s163 = sphi 0, %s163
      %s165 = sphi 0, %s163
      %s166 = sphi 0, %s165
      %s180 = sphi 0, %s166
      %s184 = sphi 0, %s184
      %s186 = sphi 0, %s184
      %s187 = sphi 0, %s186
      %s201 = sphi 0, %s187
      %s207 = sphi 0, %s209
      %s210 = sphi 0, %s207
      %s211 = sphi 0, %s210
      %s227 = sphi 0, %s211
    $region4: #{tpu_custom_call.1} parent=1 // loop_header_branch
      %27 = sbr.rel (%p25) target = $region8
    $region5: #{tpu_custom_call.1} parent=1 // loop_body
      %s29 = ssub.s32 %s24, 1
      %s30 = ssub.s32 %s24, 2
      %s31 = sadd.s32 %s24, 1
      %s32 = ssub.s32 %s24, %s31
      %p33 = scmp.eq.s32.totalorder %s32, 0
      %s35 = sadd.s32 %s34, 1
      %s36 = scalar_select %p33, %s34, %s35
      %p39 = pneg %p33
      %p40 = scmp.eq.s32.totalorder %s24, 1
      %p41 = por %p39, %p40
      %p42 = scmp.ne.s32.totalorder %s34, %s37
      %p43 = scmp.eq.s32.totalorder %s24, 0
      %p44 = por %p42, %p43
      %p45 = scmp.ne.s32.totalorder %s34, %s37
      %p46 = scmp.eq.s32.totalorder %s29, 1
      %p47 = por %p45, %p46
      %p48 = scmp.ne.s32.totalorder %s37, %s38
      %p49 = scmp.eq.s32.totalorder %s29, 0
      %p50 = por %p48, %p49
      %p51 = scmp.ne.s32.totalorder %s37, %s38
      %p52 = scmp.eq.s32.totalorder %s30, 1
      %p53 = por %p51, %p52
      %p55 = scmp.ne.s32.totalorder %s38, %s54
      %p56 = scmp.eq.s32.totalorder %s30, 0
      %p57 = por %p55, %p56
      %s59 = sadd.s32 %s58, 1
      %p62 = scmp.eq.s32.totalorder %s24, 1
      %p63 = scmp.ne.s32.totalorder %s58, %s60
      %p64 = scmp.eq.s32.totalorder %s24, 0
      %p65 = por %p63, %p64
      %p66 = scmp.ne.s32.totalorder %s58, %s60
      %p67 = scmp.eq.s32.totalorder %s29, 1
      %p68 = por %p66, %p67
      %p69 = scmp.ne.s32.totalorder %s60, %s61
      %p70 = scmp.eq.s32.totalorder %s29, 0
      %p71 = por %p69, %p70
      %p72 = scmp.ne.s32.totalorder %s60, %s61
      %p73 = scmp.eq.s32.totalorder %s30, 1
      %p74 = por %p72, %p73
      %p76 = scmp.ne.s32.totalorder %s61, %s75
      %p77 = scmp.eq.s32.totalorder %s30, 0
      %p78 = por %p76, %p77
      %s80 = sadd.s32 %s79, 1
      %p83 = scmp.eq.s32.totalorder %s24, 1
      %p84 = scmp.ne.s32.totalorder %s79, %s81
      %p85 = scmp.eq.s32.totalorder %s24, 0
      %p86 = por %p84, %p85
      %p87 = scmp.ne.s32.totalorder %s79, %s81
      %p88 = scmp.eq.s32.totalorder %s29, 1
      %p89 = por %p87, %p88
      %p90 = scmp.ne.s32.totalorder %s81, %s82
      %p91 = scmp.eq.s32.totalorder %s29, 0
      %p92 = por %p90, %p91
      %p93 = scmp.ne.s32.totalorder %s81, %s82
      %p94 = scmp.eq.s32.totalorder %s30, 1
      %p95 = por %p93, %p94
      %p97 = scmp.ne.s32.totalorder %s82, %s96
      %p98 = scmp.eq.s32.totalorder %s30, 0
      %p99 = por %p97, %p98
      %s101 = sadd.s32 %s100, 1
      %p104 = scmp.eq.s32.totalorder %s24, 1
      %p105 = scmp.ne.s32.totalorder %s100, %s102
      %p106 = scmp.eq.s32.totalorder %s24, 0
      %p107 = por %p105, %p106
      %p108 = scmp.ne.s32.totalorder %s100, %s102
      %p109 = scmp.eq.s32.totalorder %s29, 1
      %p110 = por %p108, %p109
      %p111 = scmp.ne.s32.totalorder %s102, %s103
      %p112 = scmp.eq.s32.totalorder %s29, 0
      %p113 = por %p111, %p112
      %p114 = scmp.ne.s32.totalorder %s102, %s103
      %p115 = scmp.eq.s32.totalorder %s30, 1
      %p116 = por %p114, %p115
      %p118 = scmp.ne.s32.totalorder %s103, %s117
      %p119 = scmp.eq.s32.totalorder %s30, 0
      %p120 = por %p118, %p119
      %s122 = sadd.s32 %s121, 1
      %p125 = scmp.eq.s32.totalorder %s24, 1
      %p126 = scmp.ne.s32.totalorder %s121, %s123
      %p127 = scmp.eq.s32.totalorder %s24, 0
      %p128 = por %p126, %p127
      %p129 = scmp.ne.s32.totalorder %s121, %s123
      %p130 = scmp.eq.s32.totalorder %s29, 1
      %p131 = por %p129, %p130
      %p132 = scmp.ne.s32.totalorder %s123, %s124
      %p133 = scmp.eq.s32.totalorder %s29, 0
      %p134 = por %p132, %p133
      %p135 = scmp.ne.s32.totalorder %s123, %s124
      %p136 = scmp.eq.s32.totalorder %s30, 1
      %p137 = por %p135, %p136
      %p139 = scmp.ne.s32.totalorder %s124, %s138
      %p140 = scmp.eq.s32.totalorder %s30, 0
      %p141 = por %p139, %p140
      %s143 = sadd.s32 %s142, 1
      %p146 = scmp.eq.s32.totalorder %s24, 1
      %p147 = scmp.ne.s32.totalorder %s142, %s144
      %p148 = scmp.eq.s32.totalorder %s24, 0
      %p149 = por %p147, %p148
      %p150 = scmp.ne.s32.totalorder %s142, %s144
      %p151 = scmp.eq.s32.totalorder %s29, 1
      %p152 = por %p150, %p151
      %p153 = scmp.ne.s32.totalorder %s144, %s145
      %p154 = scmp.eq.s32.totalorder %s29, 0
      %p155 = por %p153, %p154
      %p156 = scmp.ne.s32.totalorder %s144, %s145
      %p157 = scmp.eq.s32.totalorder %s30, 1
      %p158 = por %p156, %p157
      %p160 = scmp.ne.s32.totalorder %s145, %s159
      %p161 = scmp.eq.s32.totalorder %s30, 0
      %p162 = por %p160, %p161
      %s164 = sadd.s32 %s163, 1
      %p167 = scmp.eq.s32.totalorder %s24, 1
      %p168 = scmp.ne.s32.totalorder %s163, %s165
      %p169 = scmp.eq.s32.totalorder %s24, 0
      %p170 = por %p168, %p169
      %p171 = scmp.ne.s32.totalorder %s163, %s165
      %p172 = scmp.eq.s32.totalorder %s29, 1
      %p173 = por %p171, %p172
      %p174 = scmp.ne.s32.totalorder %s165, %s166
      %p175 = scmp.eq.s32.totalorder %s29, 0
      %p176 = por %p174, %p175
      %p177 = scmp.ne.s32.totalorder %s165, %s166
      %p178 = scmp.eq.s32.totalorder %s30, 1
      %p179 = por %p177, %p178
      %p181 = scmp.ne.s32.totalorder %s166, %s180
      %p182 = scmp.eq.s32.totalorder %s30, 0
      %p183 = por %p181, %p182
      %s185 = sadd.s32 %s184, 1
      %p188 = scmp.eq.s32.totalorder %s24, 1
      %p189 = scmp.ne.s32.totalorder %s184, %s186
      %p190 = scmp.eq.s32.totalorder %s24, 0
      %p191 = por %p189, %p190
      %p192 = scmp.ne.s32.totalorder %s184, %s186
      %p193 = scmp.eq.s32.totalorder %s29, 1
      %p194 = por %p192, %p193
      %p195 = scmp.ne.s32.totalorder %s186, %s187
      %p196 = scmp.eq.s32.totalorder %s29, 0
      %p197 = por %p195, %p196
      %p198 = scmp.ne.s32.totalorder %s186, %s187
      %p199 = scmp.eq.s32.totalorder %s30, 1
      %p200 = por %p198, %p199
      %p202 = scmp.ne.s32.totalorder %s187, %s201
      %p203 = scmp.eq.s32.totalorder %s30, 0
      %p204 = por %p202, %p203
      %s205 = ssub.s32 %s24, %s31
      %p206 = scmp.eq.s32.totalorder %s205, 0
      %s208 = sadd.s32 %s207, 1
      %s209 = scalar_select %p206, %s207, %s208
      %p212 = pneg %p206
      %p213 = scmp.eq.s32.totalorder %s24, 1
      %p214 = por %p212, %p213
      %p215 = scmp.ne.s32.totalorder %s207, %s210
      %p216 = scmp.eq.s32.totalorder %s24, 0
      %p217 = por %p215, %p216
      %p218 = scmp.ne.s32.totalorder %s207, %s210
      %p219 = scmp.eq.s32.totalorder %s29, 1
      %p220 = por %p218, %p219
      %p221 = scmp.ne.s32.totalorder %s210, %s211
      %p222 = scmp.eq.s32.totalorder %s29, 0
      %p223 = por %p221, %p222
      %p224 = scmp.ne.s32.totalorder %s210, %s211
      %p225 = scmp.eq.s32.totalorder %s30, 1
      %p226 = por %p224, %p225
      %p228 = scmp.ne.s32.totalorder %s211, %s227
      %p229 = scmp.eq.s32.totalorder %s30, 0
      %p230 = por %p228, %p229
      %p231 = scmp.le.s32.totalorder 1, %s24
      %p232 = scmp.lt.s32.totalorder %s24, 3
      %p233 = pnand %p231, %p232
      %p234 = pneg %p233
      // Predicated region
      $region9: #{tpu_custom_call.1} parent=5 // pred_check
        _
      $region10: #{tpu_custom_call.1} parent=5 // pred_check_branch
        %236 = sbr.rel (%p233) target = $region12
      $region11: #{tpu_custom_call.1} parent=5 // pred_region
        %s237 = ssub.s32 %s24, 1
        // Predicated region
        $region13: #{tpu_custom_call.1} parent=11 // pred_check
          %p238 = pneg %p71
        $region14: #{tpu_custom_call.1} parent=11 // pred_check_branch
          %240 = sbr.rel (%p238) target = $region16
        $region15: #{tpu_custom_call.1} parent=11 // pred_region
          %s242 = ssub.s32 1024, 1024
          %243 = vsyncadd [#allocation9], %s242
          %s244 = sshll.u32 [#allocation8], 4
          %s245 = int_to_ptr.vmem [resolvable:$true] %s244
          %250 = dma.hbm_to_vmem [thread:$0]  %s1, 1024, %s245, [#allocation9], 64, 64, 4
        $region16: #{tpu_custom_call.1} parent=11 // pred_fallthru
          _
        // Predicated region
        $region17: #{tpu_custom_call.1} parent=11 // pred_check
          %p251 = pneg %p92
        $region18: #{tpu_custom_call.1} parent=11 // pred_check_branch
          %253 = sbr.rel (%p251) target = $region20
        $region19: #{tpu_custom_call.1} parent=11 // pred_region
          %s255 = ssub.s32 1024, 1024
          %256 = vsyncadd [#allocation9], %s255
          %s257 = sshll.u32 [#allocation10], 4
          %s258 = int_to_ptr.vmem [resolvable:$true] %s257
          %263 = dma.hbm_to_vmem [thread:$0]  %s2, 1024, %s258, [#allocation9], 64, 64, 4
        $region20: #{tpu_custom_call.1} parent=11 // pred_fallthru
          _
        // Predicated region
        $region21: #{tpu_custom_call.1} parent=11 // pred_check
          %p264 = pneg %p113
        $region22: #{tpu_custom_call.1} parent=11 // pred_check_branch
          %266 = sbr.rel (%p264) target = $region24
        $region23: #{tpu_custom_call.1} parent=11 // pred_region
          %s268 = ssub.s32 1024, 1024
          %269 = vsyncadd [#allocation12], %s268
          %s270 = sshll.u32 [#allocation11], 4
          %s271 = int_to_ptr.vmem [resolvable:$true] %s270
          %276 = dma.hbm_to_vmem [thread:$0]  %s3, 1024, %s271, [#allocation12], 64, 64, 4
        $region24: #{tpu_custom_call.1} parent=11 // pred_fallthru
          _
        // Predicated region
        $region25: #{tpu_custom_call.1} parent=11 // pred_check
          %p277 = pneg %p134
        $region26: #{tpu_custom_call.1} parent=11 // pred_check_branch
          %279 = sbr.rel (%p277) target = $region28
        $region27: #{tpu_custom_call.1} parent=11 // pred_region
          %s281 = ssub.s32 1024, 1024
          %282 = vsyncadd [#allocation12], %s281
          %s283 = sshll.u32 [#allocation13], 4
          %s284 = int_to_ptr.vmem [resolvable:$true] %s283
          %289 = dma.hbm_to_vmem [thread:$0]  %s4, 1024, %s284, [#allocation12], 64, 64, 4
        $region28: #{tpu_custom_call.1} parent=11 // pred_fallthru
          _
        // Predicated region
        $region29: #{tpu_custom_call.1} parent=11 // pred_check
          %p290 = pneg %p155
        $region30: #{tpu_custom_call.1} parent=11 // pred_check_branch
          %292 = sbr.rel (%p290) target = $region32
        $region31: #{tpu_custom_call.1} parent=11 // pred_region
          %s294 = ssub.s32 2048, 2048
          %295 = vsyncadd [#allocation15], %s294
          %s296 = sshll.u32 [#allocation14], 4
          %s297 = int_to_ptr.vmem [resolvable:$true] %s296
          %302 = dma.hbm_to_vmem [thread:$0]  %s5, 2048, %s297, [#allocation15], 128, 128, 8
        $region32: #{tpu_custom_call.1} parent=11 // pred_fallthru
          _
        // Predicated region
        $region33: #{tpu_custom_call.1} parent=11 // pred_check
          %p303 = pneg %p176
        $region34: #{tpu_custom_call.1} parent=11 // pred_check_branch
          %305 = sbr.rel (%p303) target = $region36
        $region35: #{tpu_custom_call.1} parent=11 // pred_region
          %s307 = ssub.s32 2048, 2048
          %308 = vsyncadd [#allocation15], %s307
          %s309 = sshll.u32 [#allocation16], 4
          %s310 = int_to_ptr.vmem [resolvable:$true] %s309
          %315 = dma.hbm_to_vmem [thread:$0]  %s6, 2048, %s310, [#allocation15], 64, 64, 4
        $region36: #{tpu_custom_call.1} parent=11 // pred_fallthru
          _
        // Predicated region
        $region37: #{tpu_custom_call.1} parent=11 // pred_check
          %p316 = pneg %p197
        $region38: #{tpu_custom_call.1} parent=11 // pred_check_branch
          %318 = sbr.rel (%p316) target = $region40
        $region39: #{tpu_custom_call.1} parent=11 // pred_region
          %s320 = ssub.s32 512, 512
          %321 = vsyncadd [#allocation18], %s320
          %s322 = sshll.u32 [#allocation17], 4
          %s323 = int_to_ptr.vmem [resolvable:$true] %s322
          %328 = dma.hbm_to_vmem [thread:$0]  %s7, 512, %s323, [#allocation18], 256, 256, 16
        $region40: #{tpu_custom_call.1} parent=11 // pred_fallthru
          _
      $region12: #{tpu_custom_call.1} parent=5 // pred_fallthru
        _
      %p329 = scmp.lt.s32.totalorder %s24, 2
      // Predicated region
      $region41: #{tpu_custom_call.1} parent=5 // pred_check
        %p330 = pneg %p329
      $region42: #{tpu_custom_call.1} parent=5 // pred_check_branch
        %332 = sbr.rel (%p330) target = $region44
      $region43: #{tpu_custom_call.1} parent=5 // pred_region
        // Predicated region
        $region45: #{tpu_custom_call.1} parent=43 // pred_check
          %p333 = pneg %p44
        $region46: #{tpu_custom_call.1} parent=43 // pred_check_branch
          %335 = sbr.rel (%p333) target = $region48
        $region47: #{tpu_custom_call.1} parent=43 // pred_region
          %s336 = sand.u32 %s34, 1
          %s337 = scalar_lea.sflag [#allocation6], %s336
          %s338 = sand.u32 %s34, 1
          %s339 = smul.addr %s338, 16
          %s340 = scalar_lea.vmem [#allocation5], %s339
          %s342 = ssub.s32 256, 256
          %343 = vsyncadd %s337, %s342
          %s344 = smul.addr %s24, 2
          %s345 = smul.addr %s344, 128
          %s346 = scalar_lea.hbm %s0, %s345
          %s347 = sshll.u32 %s340, 4
          %s348 = int_to_ptr.vmem [resolvable:$true] %s347
          %353 = dma.hbm_to_vmem [thread:$0]  %s346, 256, %s348, %s337, 128, 128, 8
        $region48: #{tpu_custom_call.1} parent=43 // pred_fallthru
          _
      $region44: #{tpu_custom_call.1} parent=5 // pred_fallthru
        _
      %p354 = scmp.le.s32.totalorder 1, %s24
      %p355 = scmp.lt.s32.totalorder %s24, 3
      %p356 = pnand %p354, %p355
      %p357 = pneg %p356
      // Predicated region
      $region49: #{tpu_custom_call.1} parent=5 // pred_check
        _
      $region50: #{tpu_custom_call.1} parent=5 // pred_check_branch
        %359 = sbr.rel (%p356) target = $region52
      $region51: #{tpu_custom_call.1} parent=5 // pred_region
        %s360 = ssub.s32 %s24, 1
        %s361 = sand.u32 %s37, 1
        %s362 = scalar_lea.sflag [#allocation6], %s361
        %s363 = sand.u32 %s37, 1
        %s364 = smul.addr %s363, 16
        %s365 = scalar_lea.vmem [#allocation5], %s364
        // Predicated region
        $region53: #{tpu_custom_call.1} parent=51 // pred_check
          %p366 = pneg %p50
        $region54: #{tpu_custom_call.1} parent=51 // pred_check_branch
          %368 = sbr.rel (%p366) target = $region56
        $region55: #{tpu_custom_call.1} parent=51 // pred_region
          %369 = dma.done %s362, 256
        $region56: #{tpu_custom_call.1} parent=51 // pred_fallthru
          _
        // Predicated region
        $region57: #{tpu_custom_call.1} parent=51 // pred_check
          %p370 = pneg %p71
        $region58: #{tpu_custom_call.1} parent=51 // pred_check_branch
          %372 = sbr.rel (%p370) target = $region60
        $region59: #{tpu_custom_call.1} parent=51 // pred_region
          %373 = dma.done [#allocation9], 1024
        $region60: #{tpu_custom_call.1} parent=51 // pred_fallthru
          _
        // Predicated region
        $region61: #{tpu_custom_call.1} parent=51 // pred_check
          %p374 = pneg %p92
        $region62: #{tpu_custom_call.1} parent=51 // pred_check_branch
          %376 = sbr.rel (%p374) target = $region64
        $region63: #{tpu_custom_call.1} parent=51 // pred_region
          %377 = dma.done [#allocation9], 1024
        $region64: #{tpu_custom_call.1} parent=51 // pred_fallthru
          _
        // Predicated region
        $region65: #{tpu_custom_call.1} parent=51 // pred_check
          %p378 = pneg %p113
        $region66: #{tpu_custom_call.1} parent=51 // pred_check_branch
          %380 = sbr.rel (%p378) target = $region68
        $region67: #{tpu_custom_call.1} parent=51 // pred_region
          %381 = dma.done [#allocation12], 1024
        $region68: #{tpu_custom_call.1} parent=51 // pred_fallthru
          _
        // Predicated region
        $region69: #{tpu_custom_call.1} parent=51 // pred_check
          %p382 = pneg %p134
        $region70: #{tpu_custom_call.1} parent=51 // pred_check_branch
          %384 = sbr.rel (%p382) target = $region72
        $region71: #{tpu_custom_call.1} parent=51 // pred_region
          %385 = dma.done [#allocation12], 1024
        $region72: #{tpu_custom_call.1} parent=51 // pred_fallthru
          _
        // Predicated region
        $region73: #{tpu_custom_call.1} parent=51 // pred_check
          %p386 = pneg %p155
        $region74: #{tpu_custom_call.1} parent=51 // pred_check_branch
          %388 = sbr.rel (%p386) target = $region76
        $region75: #{tpu_custom_call.1} parent=51 // pred_region
          %389 = dma.done [#allocation15], 2048
        $region76: #{tpu_custom_call.1} parent=51 // pred_fallthru
          _
        // Predicated region
        $region77: #{tpu_custom_call.1} parent=51 // pred_check
          %p390 = pneg %p176
        $region78: #{tpu_custom_call.1} parent=51 // pred_check_branch
          %392 = sbr.rel (%p390) target = $region80
        $region79: #{tpu_custom_call.1} parent=51 // pred_region
          %393 = dma.done [#allocation15], 2048
        $region80: #{tpu_custom_call.1} parent=51 // pred_fallthru
          _
        // Predicated region
        $region81: #{tpu_custom_call.1} parent=51 // pred_check
          %p394 = pneg %p197
        $region82: #{tpu_custom_call.1} parent=51 // pred_check_branch
          %396 = sbr.rel (%p394) target = $region84
        $region83: #{tpu_custom_call.1} parent=51 // pred_region
          %397 = dma.done [#allocation18], 512
        $region84: #{tpu_custom_call.1} parent=51 // pred_fallthru
          _
        %s398 = sand.u32 %s37, 1
        %s399 = scalar_lea.sflag [#allocation6], %s398
        %s400 = sand.u32 %s37, 1
        %s401 = smul.addr %s400, 16
        %s402 = scalar_lea.vmem [#allocation5], %s401
        %p403 = pneg %p50
        %p404 = pneg %p47
        %p405 = pneg %p71
        %p406 = pneg %p68
        %p407 = pneg %p92
        %p408 = pneg %p89
        %p409 = pneg %p113
        %p410 = pneg %p110
        %p411 = pneg %p134
        %p412 = pneg %p131
        %p413 = pneg %p155
        %p414 = pneg %p152
        %p415 = pneg %p176
        %p416 = pneg %p173
        %p417 = pneg %p197
        %p418 = pneg %p194
        %p419 = pneg %p223
        %p420 = pneg %p220
        %s421 = sand.u32 %s210, 1
        %s422 = scalar_lea.sflag [#allocation7], %s421
        %s423 = sand.u32 %s210, 1
        %s424 = smul.addr %s423, 16
        %s425 = scalar_lea.vmem [#allocation19], %s424
        %v427 = vld [vmem:[%s365] sm:$0xff]
        %v428 = vld [vmem:[%s365 + $0x8] sm:$0xff]
        %v429 = vld [vmem:[#allocation17] sm:$0xff]
        %v430 = vld [vmem:[#allocation17 + $0x10] sm:$0x3]
        %v431 = vld [vmem:[#allocation17 + $0x18] sm:$0x3]
        %432 = vadd.xlane.f32.xlu0 %v427
        %v433 = vpop.xlane.xlu0 %432
        %434 = vadd.xlane.f32.xlu0 %v428
        %v435 = vpop.xlane.xlu0 %434
        %v436 = vrcp.pop 128.0
        %v437 = vmul.f32 %v433, %v436
        %v438 = vmul.f32 %v435, %v436
        %v439 = vsub.f32 %v427, %v437
        %v440 = vsub.f32 %v428, %v438
        %v441 = vmul.f32 %v439, %v439
        %v442 = vmul.f32 %v440, %v440
        %443 = vadd.xlane.f32.xlu0 %v441
        %v444 = vpop.xlane.xlu0 %443
        %445 = vadd.xlane.f32.xlu0 %v442
        %v446 = vpop.xlane.xlu0 %445
        %v447 = vmul.f32 %v444, %v436
        %v448 = vmul.f32 %v446, %v436
        %v449 = vadd.f32 %v447, 1e-06
        %v450 = vadd.f32 %v448, 1e-06
        %v451 = vrsqrt.pop %v449
        %v452 = vrsqrt.pop %v450
        %v453 = vmul.f32 %v439, %v451
        %v454 = vmul.f32 %v440, %v452
        %v455 = vlaneseq
        %v456 = vshrl.u32 %v455, 7
        %v457 = vsub.s32 0, %v456
        %v458 = vrot.slane %v429, %v457
        %v459 = vmul.f32 %v453, %v458
        %v460 = vmul.f32 %v454, %v458
        %v461 = vlaneseq
        %v462 = vshrl.u32 %v461, 7
        %v463 = vsub.s32 1, %v462
        %v464 = vrot.slane %v429, %v463
        %v465 = vadd.f32 %v459, %v464
        %v466 = vadd.f32 %v460, %v464
        %v467 = vpack.c.bf16 %v466, %v465
        %v468 = vld [vmem:[#allocation8] sm:$0xf]
        %v469 = vld [vmem:[#allocation8 + $0x4] sm:$0xf]
        %v470 = vld [vmem:[#allocation8 + $0x8] sm:$0xf]
        %v471 = vld [vmem:[#allocation8 + $0xc] sm:$0xf]
        %v472 = vld [vmem:[#allocation8 + $0x10] sm:$0xf]
        %v473 = vld [vmem:[#allocation8 + $0x14] sm:$0xf]
        %v474 = vld [vmem:[#allocation8 + $0x18] sm:$0xf]
        %v475 = vld [vmem:[#allocation8 + $0x1c] sm:$0xf]
        %v476 = vld [vmem:[#allocation8 + $0x20] sm:$0xf]
        %v477 = vld [vmem:[#allocation8 + $0x24] sm:$0xf]
        %v478 = vld [vmem:[#allocation8 + $0x28] sm:$0xf]
        %v479 = vld [vmem:[#allocation8 + $0x2c] sm:$0xf]
        %v480 = vld [vmem:[#allocation8 + $0x30] sm:$0xf]
        %v481 = vld [vmem:[#allocation8 + $0x34] sm:$0xf]
        %v482 = vld [vmem:[#allocation8 + $0x38] sm:$0xf]
        %v483 = vld [vmem:[#allocation8 + $0x3c] sm:$0xf]
        %v484 = vlaneseq
        %v485 = vshrl.u32 %v484, 7
        %v486 = vsub.s32 4, %v485
        %v487 = vrot.slane %v429, %v486
        %v504 = vunpack.c.l.b16 %v468
        %v505 = vunpack.c.l.b16 %v469
        %v506 = vunpack.c.l.b16 %v470
        %v507 = vunpack.c.l.b16 %v471
        %v508 = vunpack.c.l.b16 %v472
        %v509 = vunpack.c.l.b16 %v473
        %v510 = vunpack.c.l.b16 %v474
        %v511 = vunpack.c.l.b16 %v475
        %v512 = vunpack.c.l.b16 %v476
        %v513 = vunpack.c.l.b16 %v477
        %v514 = vunpack.c.l.b16 %v478
        %v515 = vunpack.c.l.b16 %v479
        %v516 = vunpack.c.l.b16 %v480
        %v517 = vunpack.c.l.b16 %v481
        %v518 = vunpack.c.l.b16 %v482
        %v519 = vunpack.c.l.b16 %v483
        %v520 = vpack.c.b16 %v505, %v504
        %v521 = vpack.c.b16 %v507, %v506
        %v522 = vpack.c.b16 %v509, %v508
        %v523 = vpack.c.b16 %v511, %v510
        %v524 = vpack.c.b16 %v513, %v512
        %v525 = vpack.c.b16 %v515, %v514
        %v526 = vpack.c.b16 %v517, %v516
        %v527 = vpack.c.b16 %v519, %v518
        %536 = vmatprep.subr.bf16.mxu0 0
        %537 = vmatpush1.bf16.msra.mxu0 %v520
        %538 = vmatprep.subr.bf16.mxu0 0
        %539 = vmatpush1.bf16.msra.mxu0 %v521
        %540 = vmatprep.subr.bf16.mxu0 0
        %541 = vmatpush1.bf16.msra.mxu0 %v522
        %542 = vmatprep.subr.bf16.mxu0 0
        %543 = vmatpush1.bf16.msra.mxu0 %v523
        %544 = vmatprep.subr.bf16.mxu0 0
        %545 = vmatpush1.bf16.msra.mxu0 %v524
        %546 = vmatprep.subr.bf16.mxu0 0
        %547 = vmatpush1.bf16.msra.mxu0 %v525
        %548 = vmatprep.subr.bf16.mxu0 0
        %549 = vmatpush1.bf16.msra.mxu0 %v526
        %550 = vmatprep.subr.bf16.mxu0 0
        %551 = vmatpush1.bf16.msra.mxu0 %v527
        %552 = vmatprep.subr.bf16.mxu0 0
        %553 = vmatpush1.bf16.msra.mxu0 0
        %554 = vmatprep.subr.bf16.mxu0 0
        %555 = vmatpush1.bf16.msra.mxu0 0
        %556 = vmatprep.subr.bf16.mxu0 0
        %557 = vmatpush1.bf16.msra.mxu0 0
        %558 = vmatprep.subr.bf16.mxu0 0
        %559 = vmatpush1.bf16.msra.mxu0 0
        %560 = vmatprep.subr.bf16.mxu0 0
        %561 = vmatpush1.bf16.msra.mxu0 0
        %562 = vmatprep.subr.bf16.mxu0 0
        %563 = vmatpush1.bf16.msra.mxu0 0
        %564 = vmatprep.subr.bf16.mxu0 0
        %565 = vmatpush1.bf16.msra.mxu0 0
        %566 = vmatprep.subr.bf16.mxu0 0
        %567 = vmatpush1.bf16.msra.mxu0 0
        %568 = vmatprep.mubr.bf16.mxu0 0
        %569 = vmatmul.mubr.bf16.gmra.mrb[0].mxu0 %v467
        %v570 = vpop.f32.mrb[0].mxu0
        %v571 = vadd.f32 %v487, %v570
        %v572 = vpop.f32.mrb[0].mxu0
        %v573 = vpop.f32.mrb[0].mxu0
        %v574 = vadd.f32 %v487, %v573
        %v575 = vpop.f32.mrb[0].mxu0
        %576 = vdwg.mxu0
        %v577 = vld [vmem:[#allocation10] sm:$0xf]
        %v578 = vld [vmem:[#allocation10 + $0x4] sm:$0xf]
        %v579 = vld [vmem:[#allocation10 + $0x8] sm:$0xf]
        %v580 = vld [vmem:[#allocation10 + $0xc] sm:$0xf]
        %v581 = vld [vmem:[#allocation10 + $0x10] sm:$0xf]
        %v582 = vld [vmem:[#allocation10 + $0x14] sm:$0xf]
        %v583 = vld [vmem:[#allocation10 + $0x18] sm:$0xf]
        %v584 = vld [vmem:[#allocation10 + $0x1c] sm:$0xf]
        %v585 = vld [vmem:[#allocation10 + $0x20] sm:$0xf]
        %v586 = vld [vmem:[#allocation10 + $0x24] sm:$0xf]
        %v587 = vld [vmem:[#allocation10 + $0x28] sm:$0xf]
        %v588 = vld [vmem:[#allocation10 + $0x2c] sm:$0xf]
        %v589 = vld [vmem:[#allocation10 + $0x30] sm:$0xf]
        %v590 = vld [vmem:[#allocation10 + $0x34] sm:$0xf]
        %v591 = vld [vmem:[#allocation10 + $0x38] sm:$0xf]
        %v592 = vld [vmem:[#allocation10 + $0x3c] sm:$0xf]
        %v593 = vlaneseq
        %v594 = vshrl.u32 %v593, 7
        %v595 = vsub.s32 5, %v594
        %v596 = vrot.slane %v429, %v595
        %v613 = vunpack.c.l.b16 %v577
        %v614 = vunpack.c.l.b16 %v578
        %v615 = vunpack.c.l.b16 %v579
        %v616 = vunpack.c.l.b16 %v580
        %v617 = vunpack.c.l.b16 %v581
        %v618 = vunpack.c.l.b16 %v582
        %v619 = vunpack.c.l.b16 %v583
        %v620 = vunpack.c.l.b16 %v584
        %v621 = vunpack.c.l.b16 %v585
        %v622 = vunpack.c.l.b16 %v586
        %v623 = vunpack.c.l.b16 %v587
        %v624 = vunpack.c.l.b16 %v588
        %v625 = vunpack.c.l.b16 %v589
        %v626 = vunpack.c.l.b16 %v590
        %v627 = vunpack.c.l.b16 %v591
        %v628 = vunpack.c.l.b16 %v592
        %v629 = vpack.c.b16 %v614, %v613
        %v630 = vpack.c.b16 %v616, %v615
        %v631 = vpack.c.b16 %v618, %v617
        %v632 = vpack.c.b16 %v620, %v619
        %v633 = vpack.c.b16 %v622, %v621
        %v634 = vpack.c.b16 %v624, %v623
        %v635 = vpack.c.b16 %v626, %v625
        %v636 = vpack.c.b16 %v628, %v627
        %645 = vmatprep.subr.bf16.mxu0 0
        %646 = vmatpush1.bf16.msra.mxu0 %v629
        %647 = vmatprep.subr.bf16.mxu0 0
        %648 = vmatpush1.bf16.msra.mxu0 %v630
        %649 = vmatprep.subr.bf16.mxu0 0
        %650 = vmatpush1.bf16.msra.mxu0 %v631
        %651 = vmatprep.subr.bf16.mxu0 0
        %652 = vmatpush1.bf16.msra.mxu0 %v632
        %653 = vmatprep.subr.bf16.mxu0 0
        %654 = vmatpush1.bf16.msra.mxu0 %v633
        %655 = vmatprep.subr.bf16.mxu0 0
        %656 = vmatpush1.bf16.msra.mxu0 %v634
        %657 = vmatprep.subr.bf16.mxu0 0
        %658 = vmatpush1.bf16.msra.mxu0 %v635
        %659 = vmatprep.subr.bf16.mxu0 0
        %660 = vmatpush1.bf16.msra.mxu0 %v636
        %661 = vmatprep.subr.bf16.mxu0 0
        %662 = vmatpush1.bf16.msra.mxu0 0
        %663 = vmatprep.subr.bf16.mxu0 0
        %664 = vmatpush1.bf16.msra.mxu0 0
        %665 = vmatprep.subr.bf16.mxu0 0
        %666 = vmatpush1.bf16.msra.mxu0 0
        %667 = vmatprep.subr.bf16.mxu0 0
        %668 = vmatpush1.bf16.msra.mxu0 0
        %669 = vmatprep.subr.bf16.mxu0 0
        %670 = vmatpush1.bf16.msra.mxu0 0
        %671 = vmatprep.subr.bf16.mxu0 0
        %672 = vmatpush1.bf16.msra.mxu0 0
        %673 = vmatprep.subr.bf16.mxu0 0
        %674 = vmatpush1.bf16.msra.mxu0 0
        %675 = vmatprep.subr.bf16.mxu0 0
        %676 = vmatpush1.bf16.msra.mxu0 0
        %677 = vmatprep.mubr.bf16.mxu0 0
        %678 = vmatmul.mubr.bf16.gmra.mrb[0].mxu0 %v467
        %v679 = vpop.f32.mrb[0].mxu0
        %v680 = vadd.f32 %v596, %v679
        %v681 = vpop.f32.mrb[0].mxu0
        %v682 = vpop.f32.mrb[0].mxu0
        %v683 = vadd.f32 %v596, %v682
        %v684 = vpop.f32.mrb[0].mxu0
        %685 = vdwg.mxu0
        %v686 = vld [vmem:[#allocation11] sm:$0xf]
        %v687 = vld [vmem:[#allocation11 + $0x4] sm:$0xf]
        %v688 = vld [vmem:[#allocation11 + $0x8] sm:$0xf]
        %v689 = vld [vmem:[#allocation11 + $0xc] sm:$0xf]
        %v690 = vld [vmem:[#allocation11 + $0x10] sm:$0xf]
        %v691 = vld [vmem:[#allocation11 + $0x14] sm:$0xf]
        %v692 = vld [vmem:[#allocation11 + $0x18] sm:$0xf]
        %v693 = vld [vmem:[#allocation11 + $0x1c] sm:$0xf]
        %v694 = vld [vmem:[#allocation11 + $0x20] sm:$0xf]
        %v695 = vld [vmem:[#allocation11 + $0x24] sm:$0xf]
        %v696 = vld [vmem:[#allocation11 + $0x28] sm:$0xf]
        %v697 = vld [vmem:[#allocation11 + $0x2c] sm:$0xf]
        %v698 = vld [vmem:[#allocation11 + $0x30] sm:$0xf]
        %v699 = vld [vmem:[#allocation11 + $0x34] sm:$0xf]
        %v700 = vld [vmem:[#allocation11 + $0x38] sm:$0xf]
        %v701 = vld [vmem:[#allocation11 + $0x3c] sm:$0xf]
        %v702 = vlaneseq
        %v703 = vshrl.u32 %v702, 7
        %v704 = vsub.s32 6, %v703
        %v705 = vrot.slane %v429, %v704
        %v722 = vunpack.c.l.b16 %v686
        %v723 = vunpack.c.l.b16 %v687
        %v724 = vunpack.c.l.b16 %v688
        %v725 = vunpack.c.l.b16 %v689
        %v726 = vunpack.c.l.b16 %v690
        %v727 = vunpack.c.l.b16 %v691
        %v728 = vunpack.c.l.b16 %v692
        %v729 = vunpack.c.l.b16 %v693
        %v730 = vunpack.c.l.b16 %v694
        %v731 = vunpack.c.l.b16 %v695
        %v732 = vunpack.c.l.b16 %v696
        %v733 = vunpack.c.l.b16 %v697
        %v734 = vunpack.c.l.b16 %v698
        %v735 = vunpack.c.l.b16 %v699
        %v736 = vunpack.c.l.b16 %v700
        %v737 = vunpack.c.l.b16 %v701
        %v738 = vpack.c.b16 %v723, %v722
        %v739 = vpack.c.b16 %v725, %v724
        %v740 = vpack.c.b16 %v727, %v726
        %v741 = vpack.c.b16 %v729, %v728
        %v742 = vpack.c.b16 %v731, %v730
        %v743 = vpack.c.b16 %v733, %v732
        %v744 = vpack.c.b16 %v735, %v734
        %v745 = vpack.c.b16 %v737, %v736
        %754 = vmatprep.subr.bf16.mxu0 0
        %755 = vmatpush1.bf16.msra.mxu0 %v738
        %756 = vmatprep.subr.bf16.mxu0 0
        %757 = vmatpush1.bf16.msra.mxu0 %v739
        %758 = vmatprep.subr.bf16.mxu0 0
        %759 = vmatpush1.bf16.msra.mxu0 %v740
        %760 = vmatprep.subr.bf16.mxu0 0
        %761 = vmatpush1.bf16.msra.mxu0 %v741
        %762 = vmatprep.subr.bf16.mxu0 0
        %763 = vmatpush1.bf16.msra.mxu0 %v742
        %764 = vmatprep.subr.bf16.mxu0 0
        %765 = vmatpush1.bf16.msra.mxu0 %v743
        %766 = vmatprep.subr.bf16.mxu0 0
        %767 = vmatpush1.bf16.msra.mxu0 %v744
        %768 = vmatprep.subr.bf16.mxu0 0
        %769 = vmatpush1.bf16.msra.mxu0 %v745
        %770 = vmatprep.subr.bf16.mxu0 0
        %771 = vmatpush1.bf16.msra.mxu0 0
        %772 = vmatprep.subr.bf16.mxu0 0
        %773 = vmatpush1.bf16.msra.mxu0 0
        %774 = vmatprep.subr.bf16.mxu0 0
        %775 = vmatpush1.bf16.msra.mxu0 0
        %776 = vmatprep.subr.bf16.mxu0 0
        %777 = vmatpush1.bf16.msra.mxu0 0
        %778 = vmatprep.subr.bf16.mxu0 0
        %779 = vmatpush1.bf16.msra.mxu0 0
        %780 = vmatprep.subr.bf16.mxu0 0
        %781 = vmatpush1.bf16.msra.mxu0 0
        %782 = vmatprep.subr.bf16.mxu0 0
        %783 = vmatpush1.bf16.msra.mxu0 0
        %784 = vmatprep.subr.bf16.mxu0 0
        %785 = vmatpush1.bf16.msra.mxu0 0
        %786 = vmatprep.mubr.bf16.mxu0 0
        %787 = vmatmul.mubr.bf16.gmra.mrb[0].mxu0 %v467
        %v788 = vpop.f32.mrb[0].mxu0
        %v789 = vadd.f32 %v705, %v788
        %v790 = vpop.f32.mrb[0].mxu0
        %v791 = vpop.f32.mrb[0].mxu0
        %v792 = vadd.f32 %v705, %v791
        %v793 = vpop.f32.mrb[0].mxu0
        %794 = vdwg.mxu0
        %v795 = vpack.c.bf16 %v574, %v571
        %vm796 = vcmask 261120
        %797 = vst.msk [vmem:[#allocation2] sm:$0xff] %vm796, %v795
        %v798 = vpack.c.bf16 %v683, %v680
        %799 = vst.msk [vmem:[#allocation3] sm:$0xff] %vm796, %v798
        %v800 = vpack.c.bf16 %v792, %v789
        %801 = vst.msk [vmem:[#allocation4] sm:$0xff] %vm796, %v800
        %803 = vrot.lane.b32.xlu0 %v795, 96
        %v804 = vpop.permute.xlu0 %803
        %s806 = scalar_lea.vmem [#allocation2], 8
        %807 = vst.msk [vmem:[%s806] sm:$0xff] %vm796, %v804
        %809 = vrot.lane.b32.xlu0 %v798, 96
        %v810 = vpop.permute.xlu0 %809
        %s812 = scalar_lea.vmem [#allocation3], 8
        %813 = vst.msk [vmem:[%s812] sm:$0xff] %vm796, %v810
        %815 = vrot.lane.b32.xlu0 %v800, 96
        %v816 = vpop.permute.xlu0 %815
        %s818 = scalar_lea.vmem [#allocation4], 8
        %819 = vst.msk [vmem:[%s818] sm:$0xff] %vm796, %v816
        %820 = vrot.lane.b32.xlu0 %v795, 64
        %v821 = vpop.permute.xlu0 %820
        %s823 = scalar_lea.vmem [#allocation2], 16
        %824 = vst.msk [vmem:[%s823] sm:$0xff] %vm796, %v821
        %825 = vrot.lane.b32.xlu0 %v798, 64
        %v826 = vpop.permute.xlu0 %825
        %s828 = scalar_lea.vmem [#allocation3], 16
        %829 = vst.msk [vmem:[%s828] sm:$0xff] %vm796, %v826
        %830 = vrot.lane.b32.xlu0 %v800, 64
        %v831 = vpop.permute.xlu0 %830
        %s833 = scalar_lea.vmem [#allocation4], 16
        %834 = vst.msk [vmem:[%s833] sm:$0xff] %vm796, %v831
        %835 = vrot.lane.b32.xlu0 %v795, 32
        %v836 = vpop.permute.xlu0 %835
        %s838 = scalar_lea.vmem [#allocation2], 24
        %839 = vst.msk [vmem:[%s838] sm:$0xff] %vm796, %v836
        %840 = vrot.lane.b32.xlu0 %v798, 32
        %v841 = vpop.permute.xlu0 %840
        %s843 = scalar_lea.vmem [#allocation3], 24
        %844 = vst.msk [vmem:[%s843] sm:$0xff] %vm796, %v841
        %845 = vrot.lane.b32.xlu0 %v800, 32
        %v846 = vpop.permute.xlu0 %845
        %s848 = scalar_lea.vmem [#allocation4], 24
        %849 = vst.msk [vmem:[%s848] sm:$0xff] %vm796, %v846
        %v850 = vld [vmem:[#allocation2] sm:$0xff]
        %v851 = vld [vmem:[#allocation2 + $0x8] sm:$0xff]
        %v852 = vld [vmem:[#allocation2 + $0x10] sm:$0xff]
        %v853 = vld [vmem:[#allocation2 + $0x18] sm:$0xff]
        %v854 = vld [vmem:[#allocation3] sm:$0xff]
        %v855 = vld [vmem:[#allocation3 + $0x8] sm:$0xff]
        %v856 = vld [vmem:[#allocation3 + $0x10] sm:$0xff]
        %v857 = vld [vmem:[#allocation3 + $0x18] sm:$0xff]
        %v858 = vld [vmem:[#allocation4] sm:$0xff]
        %v859 = vld [vmem:[#allocation4 + $0x8] sm:$0xff]
        %v860 = vld [vmem:[#allocation4 + $0x10] sm:$0xff]
        %v861 = vld [vmem:[#allocation4 + $0x18] sm:$0xff]
        %v863 = vsel %vm796, %v850, 0
        %v866 = vsel %vm796, %v854, 0
        %868 = vmatprep.subr.bf16.mxu0 0
        %869 = vmatpush1.bf16.xpose.msra.mxu0 %v866
        %870 = vmatprep.subr.bf16.mxu0 0
        %871 = vmatpush1.bf16.xpose.msra.mxu0 0
        %872 = vmatprep.subr.bf16.mxu0 0
        %873 = vmatpush1.bf16.xpose.msra.mxu0 0
        %874 = vmatprep.subr.bf16.mxu0 0
        %875 = vmatpush1.bf16.xpose.msra.mxu0 0
        %876 = vmatprep.subr.bf16.mxu0 0
        %877 = vmatpush1.bf16.xpose.msra.mxu0 0
        %878 = vmatprep.subr.bf16.mxu0 0
        %879 = vmatpush1.bf16.xpose.msra.mxu0 0
        %880 = vmatprep.subr.bf16.mxu0 0
        %881 = vmatpush1.bf16.xpose.msra.mxu0 0
        %882 = vmatprep.subr.bf16.mxu0 0
        %883 = vmatpush1.bf16.xpose.msra.mxu0 0
        %884 = vmatprep.subr.bf16.mxu0 0
        %885 = vmatpush1.bf16.xpose.msra.mxu0 0
        %886 = vmatprep.subr.bf16.mxu0 0
        %887 = vmatpush1.bf16.xpose.msra.mxu0 0
        %888 = vmatprep.subr.bf16.mxu0 0
        %889 = vmatpush1.bf16.xpose.msra.mxu0 0
        %890 = vmatprep.subr.bf16.mxu0 0
        %891 = vmatpush1.bf16.xpose.msra.mxu0 0
        %892 = vmatprep.subr.bf16.mxu0 0
        %893 = vmatpush1.bf16.xpose.msra.mxu0 0
        %894 = vmatprep.subr.bf16.mxu0 0
        %895 = vmatpush1.bf16.xpose.msra.mxu0 0
        %896 = vmatprep.subr.bf16.mxu0 0
        %897 = vmatpush1.bf16.xpose.msra.mxu0 0
        %898 = vmatprep.subr.bf16.mxu0 0
        %899 = vmatpush1.bf16.xpose.msra.mxu0 0
        %900 = vmatprep.mubr.bf16.mxu0 0
        %901 = vmatmul.mubr.bf16.gmra.mrb[0].mxu0 %v863
        %v902 = vpop.f32.mrb[0].mxu0
        %v903 = vadd.f32 0.0, %v902
        %v904 = vpop.f32.mrb[0].mxu0
        %v905 = vpop.f32.mrb[0].mxu0
        %v906 = vadd.f32 0.0, %v905
        %v907 = vpop.f32.mrb[0].mxu0
        %908 = vdwg.mxu0
        %v910 = vsel %vm796, %v851, 0
        %v913 = vsel %vm796, %v855, 0
        %915 = vmatprep.subr.bf16.mxu0 0
        %916 = vmatpush1.bf16.xpose.msra.mxu0 %v913
        %917 = vmatprep.subr.bf16.mxu0 0
        %918 = vmatpush1.bf16.xpose.msra.mxu0 0
        %919 = vmatprep.subr.bf16.mxu0 0
        %920 = vmatpush1.bf16.xpose.msra.mxu0 0
        %921 = vmatprep.subr.bf16.mxu0 0
        %922 = vmatpush1.bf16.xpose.msra.mxu0 0
        %923 = vmatprep.subr.bf16.mxu0 0
        %924 = vmatpush1.bf16.xpose.msra.mxu0 0
        %925 = vmatprep.subr.bf16.mxu0 0
        %926 = vmatpush1.bf16.xpose.msra.mxu0 0
        %927 = vmatprep.subr.bf16.mxu0 0
        %928 = vmatpush1.bf16.xpose.msra.mxu0 0
        %929 = vmatprep.subr.bf16.mxu0 0
        %930 = vmatpush1.bf16.xpose.msra.mxu0 0
        %931 = vmatprep.subr.bf16.mxu0 0
        %932 = vmatpush1.bf16.xpose.msra.mxu0 0
        %933 = vmatprep.subr.bf16.mxu0 0
        %934 = vmatpush1.bf16.xpose.msra.mxu0 0
        %935 = vmatprep.subr.bf16.mxu0 0
        %936 = vmatpush1.bf16.xpose.msra.mxu0 0
        %937 = vmatprep.subr.bf16.mxu0 0
        %938 = vmatpush1.bf16.xpose.msra.mxu0 0
        %939 = vmatprep.subr.bf16.mxu0 0
        %940 = vmatpush1.bf16.xpose.msra.mxu0 0
        %941 = vmatprep.subr.bf16.mxu0 0
        %942 = vmatpush1.bf16.xpose.msra.mxu0 0
        %943 = vmatprep.subr.bf16.mxu0 0
        %944 = vmatpush1.bf16.xpose.msra.mxu0 0
        %945 = vmatprep.subr.bf16.mxu0 0
        %946 = vmatpush1.bf16.xpose.msra.mxu0 0
        %947 = vmatprep.mubr.bf16.mxu0 0
        %948 = vmatmul.mubr.bf16.gmra.mrb[0].mxu0 %v910
        %v949 = vpop.f32.mrb[0].mxu0
        %v950 = vadd.f32 0.0, %v949
        %v951 = vpop.f32.mrb[0].mxu0
        %v952 = vpop.f32.mrb[0].mxu0
        %v953 = vadd.f32 0.0, %v952
        %v954 = vpop.f32.mrb[0].mxu0
        %955 = vdwg.mxu0
        %v957 = vsel %vm796, %v852, 0
        %v960 = vsel %vm796, %v856, 0
        %962 = vmatprep.subr.bf16.mxu0 0
        %963 = vmatpush1.bf16.xpose.msra.mxu0 %v960
        %964 = vmatprep.subr.bf16.mxu0 0
        %965 = vmatpush1.bf16.xpose.msra.mxu0 0
        %966 = vmatprep.subr.bf16.mxu0 0
        %967 = vmatpush1.bf16.xpose.msra.mxu0 0
        %968 = vmatprep.subr.bf16.mxu0 0
        %969 = vmatpush1.bf16.xpose.msra.mxu0 0
        %970 = vmatprep.subr.bf16.mxu0 0
        %971 = vmatpush1.bf16.xpose.msra.mxu0 0
        %972 = vmatprep.subr.bf16.mxu0 0
        %973 = vmatpush1.bf16.xpose.msra.mxu0 0
        %974 = vmatprep.subr.bf16.mxu0 0
        %975 = vmatpush1.bf16.xpose.msra.mxu0 0
        %976 = vmatprep.subr.bf16.mxu0 0
        %977 = vmatpush1.bf16.xpose.msra.mxu0 0
        %978 = vmatprep.subr.bf16.mxu0 0
        %979 = vmatpush1.bf16.xpose.msra.mxu0 0
        %980 = vmatprep.subr.bf16.mxu0 0
        %981 = vmatpush1.bf16.xpose.msra.mxu0 0
        %982 = vmatprep.subr.bf16.mxu0 0
        %983 = vmatpush1.bf16.xpose.msra.mxu0 0
        %984 = vmatprep.subr.bf16.mxu0 0
        %985 = vmatpush1.bf16.xpose.msra.mxu0 0
        %986 = vmatprep.subr.bf16.mxu0 0
        %987 = vmatpush1.bf16.xpose.msra.mxu0 0
        %988 = vmatprep.subr.bf16.mxu0 0
        %989 = vmatpush1.bf16.xpose.msra.mxu0 0
        %990 = vmatprep.subr.bf16.mxu0 0
        %991 = vmatpush1.bf16.xpose.msra.mxu0 0
        %992 = vmatprep.subr.bf16.mxu0 0
        %993 = vmatpush1.bf16.xpose.msra.mxu0 0
        %994 = vmatprep.mubr.bf16.mxu0 0
        %995 = vmatmul.mubr.bf16.gmra.mrb[0].mxu0 %v957
        %v996 = vpop.f32.mrb[0].mxu0
        %v997 = vadd.f32 0.0, %v996
        %v998 = vpop.f32.mrb[0].mxu0
        %v999 = vpop.f32.mrb[0].mxu0
        %v1000 = vadd.f32 0.0, %v999
        %v1001 = vpop.f32.mrb[0].mxu0
        %1002 = vdwg.mxu0
        %v1004 = vsel %vm796, %v853, 0
        %v1007 = vsel %vm796, %v857, 0
        %1009 = vmatprep.subr.bf16.mxu0 0
        %1010 = vmatpush1.bf16.xpose.msra.mxu0 %v1007
        %1011 = vmatprep.subr.bf16.mxu0 0
        %1012 = vmatpush1.bf16.xpose.msra.mxu0 0
        %1013 = vmatprep.subr.bf16.mxu0 0
        %1014 = vmatpush1.bf16.xpose.msra.mxu0 0
        %1015 = vmatprep.subr.bf16.mxu0 0
        %1016 = vmatpush1.bf16.xpose.msra.mxu0 0
        %1017 = vmatprep.subr.bf16.mxu0 0
        %1018 = vmatpush1.bf16.xpose.msra.mxu0 0
        %1019 = vmatprep.subr.bf16.mxu0 0
        %1020 = vmatpush1.bf16.xpose.msra.mxu0 0
        %1021 = vmatprep.subr.bf16.mxu0 0
        %1022 = vmatpush1.bf16.xpose.msra.mxu0 0
        %1023 = vmatprep.subr.bf16.mxu0 0
        %1024 = vmatpush1.bf16.xpose.msra.mxu0 0
        %1025 = vmatprep.subr.bf16.mxu0 0
        %1026 = vmatpush1.bf16.xpose.msra.mxu0 0
        %1027 = vmatprep.subr.bf16.mxu0 0
        %1028 = vmatpush1.bf16.xpose.msra.mxu0 0
        %1029 = vmatprep.subr.bf16.mxu0 0
        %1030 = vmatpush1.bf16.xpose.msra.mxu0 0
        %1031 = vmatprep.subr.bf16.mxu0 0
        %1032 = vmatpush1.bf16.xpose.msra.mxu0 0
        %1033 = vmatprep.subr.bf16.mxu0 0
        %1034 = vmatpush1.bf16.xpose.msra.mxu0 0
        %1035 = vmatprep.subr.bf16.mxu0 0
        %1036 = vmatpush1.bf16.xpose.msra.mxu0 0
        %1037 = vmatprep.subr.bf16.mxu0 0
        %1038 = vmatpush1.bf16.xpose.msra.mxu0 0
        %1039 = vmatprep.subr.bf16.mxu0 0
        %1040 = vmatpush1.bf16.xpose.msra.mxu0 0
        %1041 = vmatprep.mubr.bf16.mxu0 0
        %1042 = vmatmul.mubr.bf16.gmra.mrb[0].mxu0 %v1004
        %v1043 = vpop.f32.mrb[0].mxu0
        %v1044 = vadd.f32 0.0, %v1043
        %v1045 = vpop.f32.mrb[0].mxu0
        %v1046 = vpop.f32.mrb[0].mxu0
        %v1047 = vadd.f32 0.0, %v1046
        %v1048 = vpop.f32.mrb[0].mxu0
        %1049 = vdwg.mxu0
        %vm1050 = vcmask 130048
        %v1051 = vsel %vm1050, %v903, -inf
        %1052 = vmax.xlane.f32.xlu0 %v1051
        %v1053 = vpop.xlane.xlu0 %1052
        %v1054 = vsel %vm1050, %v906, -inf
        %1055 = vmax.xlane.f32.xlu0 %v1054
        %v1056 = vpop.xlane.xlu0 %1055
        %v1057 = vsel %vm1050, %v950, -inf
        %1058 = vmax.xlane.f32.xlu0 %v1057
        %v1059 = vpop.xlane.xlu0 %1058
        %v1060 = vsel %vm1050, %v953, -inf
        %1061 = vmax.xlane.f32.xlu0 %v1060
        %v1062 = vpop.xlane.xlu0 %1061
        %v1063 = vsel %vm1050, %v997, -inf
        %1064 = vmax.xlane.f32.xlu0 %v1063
        %v1065 = vpop.xlane.xlu0 %1064
        %v1066 = vsel %vm1050, %v1000, -inf
        %1067 = vmax.xlane.f32.xlu0 %v1066
        %v1068 = vpop.xlane.xlu0 %1067
        %v1069 = vsel %vm1050, %v1044, -inf
        %1070 = vmax.xlane.f32.xlu0 %v1069
        %v1071 = vpop.xlane.xlu0 %1070
        %v1072 = vsel %vm1050, %v1047, -inf
        %1073 = vmax.xlane.f32.xlu0 %v1072
        %v1074 = vpop.xlane.xlu0 %1073
        %v1075 = vsub.f32 %v903, %v1053
        %v1076 = vsub.f32 %v906, %v1056
        %v1077 = vsub.f32 %v950, %v1059
        %v1078 = vsub.f32 %v953, %v1062
        %v1079 = vsub.f32 %v997, %v1065
        %v1080 = vsub.f32 %v1000, %v1068
        %v1081 = vsub.f32 %v1044, %v1071
        %v1082 = vsub.f32 %v1047, %v1074
        %v1083 = vmul.f32 %v1075, 1.442695
        %v1084 = vpow.pop %v1083
        %v1085 = vmul.f32 %v1076, 1.442695
        %v1086 = vpow.pop %v1085
        %v1087 = vmul.f32 %v1077, 1.442695
        %v1088 = vpow.pop %v1087
        %v1089 = vmul.f32 %v1078, 1.442695
        %v1090 = vpow.pop %v1089
        %v1091 = vmul.f32 %v1079, 1.442695
        %v1092 = vpow.pop %v1091
        %v1093 = vmul.f32 %v1080, 1.442695
        %v1094 = vpow.pop %v1093
        %v1095 = vmul.f32 %v1081, 1.442695
        %v1096 = vpow.pop %v1095
        %v1097 = vmul.f32 %v1082, 1.442695
        %v1098 = vpow.pop %v1097
        %v1099 = vsel %vm1050, %v1084, 0.0
        %1100 = vadd.xlane.f32.xlu0 %v1099
        %v1101 = vpop.xlane.xlu0 %1100
        %v1102 = vsel %vm1050, %v1086, 0.0
        %1103 = vadd.xlane.f32.xlu0 %v1102
        %v1104 = vpop.xlane.xlu0 %1103
        %v1105 = vsel %vm1050, %v1088, 0.0
        %1106 = vadd.xlane.f32.xlu0 %v1105
        %v1107 = vpop.xlane.xlu0 %1106
        %v1108 = vsel %vm1050, %v1090, 0.0
        %1109 = vadd.xlane.f32.xlu0 %v1108
        %v1110 = vpop.xlane.xlu0 %1109
        %v1111 = vsel %vm1050, %v1092, 0.0
        %1112 = vadd.xlane.f32.xlu0 %v1111
        %v1113 = vpop.xlane.xlu0 %1112
        %v1114 = vsel %vm1050, %v1094, 0.0
        %1115 = vadd.xlane.f32.xlu0 %v1114
        %v1116 = vpop.xlane.xlu0 %1115
        %v1117 = vsel %vm1050, %v1096, 0.0
        %1118 = vadd.xlane.f32.xlu0 %v1117
        %v1119 = vpop.xlane.xlu0 %1118
        %v1120 = vsel %vm1050, %v1098, 0.0
        %1121 = vadd.xlane.f32.xlu0 %v1120
        %v1122 = vpop.xlane.xlu0 %1121
        %v1123 = vrcp.pop %v1101
        %v1124 = vmul.f32 %v1084, %v1123
        %v1125 = vrcp.pop %v1104
        %v1126 = vmul.f32 %v1086, %v1125
        %v1127 = vrcp.pop %v1107
        %v1128 = vmul.f32 %v1088, %v1127
        %v1129 = vrcp.pop %v1110
        %v1130 = vmul.f32 %v1090, %v1129
        %v1131 = vrcp.pop %v1113
        %v1132 = vmul.f32 %v1092, %v1131
        %v1133 = vrcp.pop %v1116
        %v1134 = vmul.f32 %v1094, %v1133
        %v1135 = vrcp.pop %v1119
        %v1136 = vmul.f32 %v1096, %v1135
        %v1137 = vrcp.pop %v1122
        %v1138 = vmul.f32 %v1098, %v1137
        %v1139 = vpack.c.bf16 %v1126, %v1124
        %v1140 = vpack.c.bf16 %v1130, %v1128
        %v1141 = vpack.c.bf16 %v1134, %v1132
        %v1142 = vpack.c.bf16 %v1138, %v1136
        %v1144 = vsel %vm1050, %v1139, 0
        %1146 = vmatprep.subr.bf16.mxu0 0
        %1147 = vmatpush1.bf16.msra.mxu0 %v858
        %1148 = vmatprep.subr.bf16.mxu0 0
        %1149 = vmatpush1.bf16.msra.mxu0 0
        %1150 = vmatprep.subr.bf16.mxu0 0
        %1151 = vmatpush1.bf16.msra.mxu0 0
        %1152 = vmatprep.subr.bf16.mxu0 0
        %1153 = vmatpush1.bf16.msra.mxu0 0
        %1154 = vmatprep.subr.bf16.mxu0 0
        %1155 = vmatpush1.bf16.msra.mxu0 0
        %1156 = vmatprep.subr.bf16.mxu0 0
        %1157 = vmatpush1.bf16.msra.mxu0 0
        %1158 = vmatprep.subr.bf16.mxu0 0
        %1159 = vmatpush1.bf16.msra.mxu0 0
        %1160 = vmatprep.subr.bf16.mxu0 0
        %1161 = vmatpush1.bf16.msra.mxu0 0
        %1162 = vmatprep.subr.bf16.mxu0 0
        %1163 = vmatpush1.bf16.msra.mxu0 0
        %1164 = vmatprep.subr.bf16.mxu0 0
        %1165 = vmatpush1.bf16.msra.mxu0 0
        %1166 = vmatprep.subr.bf16.mxu0 0
        %1167 = vmatpush1.bf16.msra.mxu0 0
        %1168 = vmatprep.subr.bf16.mxu0 0
        %1169 = vmatpush1.bf16.msra.mxu0 0
        %1170 = vmatprep.subr.bf16.mxu0 0
        %1171 = vmatpush1.bf16.msra.mxu0 0
        %1172 = vmatprep.subr.bf16.mxu0 0
        %1173 = vmatpush1.bf16.msra.mxu0 0
        %1174 = vmatprep.subr.bf16.mxu0 0
        %1175 = vmatpush1.bf16.msra.mxu0 0
        %1176 = vmatprep.subr.bf16.mxu0 0
        %1177 = vmatpush1.bf16.msra.mxu0 0
        %1178 = vmatprep.mubr.bf16.mxu0 0
        %1179 = vmatmul.mubr.bf16.gmra.mrb[0].mxu0 %v1144
        %v1180 = vpop.f32.mrb[0].mxu0
        %v1181 = vadd.f32 0.0, %v1180
        %v1182 = vpop.f32.mrb[0].mxu0
        %v1183 = vpop.f32.mrb[0].mxu0
        %v1184 = vadd.f32 0.0, %v1183
        %v1185 = vpop.f32.mrb[0].mxu0
        %1186 = vdwg.mxu0
        %v1188 = vsel %vm1050, %v1140, 0
        %1190 = vmatprep.subr.bf16.mxu0 0
        %1191 = vmatpush1.bf16.msra.mxu0 %v859
        %1192 = vmatprep.subr.bf16.mxu0 0
        %1193 = vmatpush1.bf16.msra.mxu0 0
        %1194 = vmatprep.subr.bf16.mxu0 0
        %1195 = vmatpush1.bf16.msra.mxu0 0
        %1196 = vmatprep.subr.bf16.mxu0 0
        %1197 = vmatpush1.bf16.msra.mxu0 0
        %1198 = vmatprep.subr.bf16.mxu0 0
        %1199 = vmatpush1.bf16.msra.mxu0 0
        %1200 = vmatprep.subr.bf16.mxu0 0
        %1201 = vmatpush1.bf16.msra.mxu0 0
        %1202 = vmatprep.subr.bf16.mxu0 0
        %1203 = vmatpush1.bf16.msra.mxu0 0
        %1204 = vmatprep.subr.bf16.mxu0 0
        %1205 = vmatpush1.bf16.msra.mxu0 0
        %1206 = vmatprep.subr.bf16.mxu0 0
        %1207 = vmatpush1.bf16.msra.mxu0 0
        %1208 = vmatprep.subr.bf16.mxu0 0
        %1209 = vmatpush1.bf16.msra.mxu0 0
        %1210 = vmatprep.subr.bf16.mxu0 0
        %1211 = vmatpush1.bf16.msra.mxu0 0
        %1212 = vmatprep.subr.bf16.mxu0 0
        %1213 = vmatpush1.bf16.msra.mxu0 0
        %1214 = vmatprep.subr.bf16.mxu0 0
        %1215 = vmatpush1.bf16.msra.mxu0 0
        %1216 = vmatprep.subr.bf16.mxu0 0
        %1217 = vmatpush1.bf16.msra.mxu0 0
        %1218 = vmatprep.subr.bf16.mxu0 0
        %1219 = vmatpush1.bf16.msra.mxu0 0
        %1220 = vmatprep.subr.bf16.mxu0 0
        %1221 = vmatpush1.bf16.msra.mxu0 0
        %1222 = vmatprep.mubr.bf16.mxu0 0
        %1223 = vmatmul.mubr.bf16.gmra.mrb[0].mxu0 %v1188
        %v1224 = vpop.f32.mrb[0].mxu0
        %v1225 = vadd.f32 0.0, %v1224
        %v1226 = vpop.f32.mrb[0].mxu0
        %v1227 = vpop.f32.mrb[0].mxu0
        %v1228 = vadd.f32 0.0, %v1227
        %v1229 = vpop.f32.mrb[0].mxu0
        %1230 = vdwg.mxu0
        %v1232 = vsel %vm1050, %v1141, 0
        %1234 = vmatprep.subr.bf16.mxu0 0
        %1235 = vmatpush1.bf16.msra.mxu0 %v860
        %1236 = vmatprep.subr.bf16.mxu0 0
        %1237 = vmatpush1.bf16.msra.mxu0 0
        %1238 = vmatprep.subr.bf16.mxu0 0
        %1239 = vmatpush1.bf16.msra.mxu0 0
        %1240 = vmatprep.subr.bf16.mxu0 0
        %1241 = vmatpush1.bf16.msra.mxu0 0
        %1242 = vmatprep.subr.bf16.mxu0 0
        %1243 = vmatpush1.bf16.msra.mxu0 0
        %1244 = vmatprep.subr.bf16.mxu0 0
        %1245 = vmatpush1.bf16.msra.mxu0 0
        %1246 = vmatprep.subr.bf16.mxu0 0
        %1247 = vmatpush1.bf16.msra.mxu0 0
        %1248 = vmatprep.subr.bf16.mxu0 0
        %1249 = vmatpush1.bf16.msra.mxu0 0
        %1250 = vmatprep.subr.bf16.mxu0 0
        %1251 = vmatpush1.bf16.msra.mxu0 0
        %1252 = vmatprep.subr.bf16.mxu0 0
        %1253 = vmatpush1.bf16.msra.mxu0 0
        %1254 = vmatprep.subr.bf16.mxu0 0
        %1255 = vmatpush1.bf16.msra.mxu0 0
        %1256 = vmatprep.subr.bf16.mxu0 0
        %1257 = vmatpush1.bf16.msra.mxu0 0
        %1258 = vmatprep.subr.bf16.mxu0 0
        %1259 = vmatpush1.bf16.msra.mxu0 0
        %1260 = vmatprep.subr.bf16.mxu0 0
        %1261 = vmatpush1.bf16.msra.mxu0 0
        %1262 = vmatprep.subr.bf16.mxu0 0
        %1263 = vmatpush1.bf16.msra.mxu0 0
        %1264 = vmatprep.subr.bf16.mxu0 0
        %1265 = vmatpush1.bf16.msra.mxu0 0
        %1266 = vmatprep.mubr.bf16.mxu0 0
        %1267 = vmatmul.mubr.bf16.gmra.mrb[0].mxu0 %v1232
        %v1268 = vpop.f32.mrb[0].mxu0
        %v1269 = vadd.f32 0.0, %v1268
        %v1270 = vpop.f32.mrb[0].mxu0
        %v1271 = vpop.f32.mrb[0].mxu0
        %v1272 = vadd.f32 0.0, %v1271
        %v1273 = vpop.f32.mrb[0].mxu0
        %1274 = vdwg.mxu0
        %v1276 = vsel %vm1050, %v1142, 0
        %1278 = vmatprep.subr.bf16.mxu0 0
        %1279 = vmatpush1.bf16.msra.mxu0 %v861
        %1280 = vmatprep.subr.bf16.mxu0 0
        %1281 = vmatpush1.bf16.msra.mxu0 0
        %1282 = vmatprep.subr.bf16.mxu0 0
        %1283 = vmatpush1.bf16.msra.mxu0 0
        %1284 = vmatprep.subr.bf16.mxu0 0
        %1285 = vmatpush1.bf16.msra.mxu0 0
        %1286 = vmatprep.subr.bf16.mxu0 0
        %1287 = vmatpush1.bf16.msra.mxu0 0
        %1288 = vmatprep.subr.bf16.mxu0 0
        %1289 = vmatpush1.bf16.msra.mxu0 0
        %1290 = vmatprep.subr.bf16.mxu0 0
        %1291 = vmatpush1.bf16.msra.mxu0 0
        %1292 = vmatprep.subr.bf16.mxu0 0
        %1293 = vmatpush1.bf16.msra.mxu0 0
        %1294 = vmatprep.subr.bf16.mxu0 0
        %1295 = vmatpush1.bf16.msra.mxu0 0
        %1296 = vmatprep.subr.bf16.mxu0 0
        %1297 = vmatpush1.bf16.msra.mxu0 0
        %1298 = vmatprep.subr.bf16.mxu0 0
        %1299 = vmatpush1.bf16.msra.mxu0 0
        %1300 = vmatprep.subr.bf16.mxu0 0
        %1301 = vmatpush1.bf16.msra.mxu0 0
        %1302 = vmatprep.subr.bf16.mxu0 0
        %1303 = vmatpush1.bf16.msra.mxu0 0
        %1304 = vmatprep.subr.bf16.mxu0 0
        %1305 = vmatpush1.bf16.msra.mxu0 0
        %1306 = vmatprep.subr.bf16.mxu0 0
        %1307 = vmatpush1.bf16.msra.mxu0 0
        %1308 = vmatprep.subr.bf16.mxu0 0
        %1309 = vmatpush1.bf16.msra.mxu0 0
        %1310 = vmatprep.mubr.bf16.mxu0 0
        %1311 = vmatmul.mubr.bf16.gmra.mrb[0].mxu0 %v1276
        %v1312 = vpop.f32.mrb[0].mxu0
        %v1313 = vadd.f32 0.0, %v1312
        %v1314 = vpop.f32.mrb[0].mxu0
        %v1315 = vpop.f32.mrb[0].mxu0
        %v1316 = vadd.f32 0.0, %v1315
        %v1317 = vpop.f32.mrb[0].mxu0
        %1318 = vdwg.mxu0
        %v1319 = vpack.c.bf16 %v1184, %v1181
        %v1320 = vpack.c.bf16 %v1228, %v1225
        %v1321 = vpack.c.bf16 %v1272, %v1269
        %v1322 = vpack.c.bf16 %v1316, %v1313
        %v1323 = vld [vmem:[#allocation13] sm:$0xf]
        %v1324 = vld [vmem:[#allocation13 + $0x4] sm:$0xf]
        %v1325 = vld [vmem:[#allocation13 + $0x8] sm:$0xf]
        %v1326 = vld [vmem:[#allocation13 + $0xc] sm:$0xf]
        %v1327 = vld [vmem:[#allocation13 + $0x10] sm:$0xf]
        %v1328 = vld [vmem:[#allocation13 + $0x14] sm:$0xf]
        %v1329 = vld [vmem:[#allocation13 + $0x18] sm:$0xf]
        %v1330 = vld [vmem:[#allocation13 + $0x1c] sm:$0xf]
        %v1331 = vld [vmem:[#allocation13 + $0x20] sm:$0xf]
        %v1332 = vld [vmem:[#allocation13 + $0x24] sm:$0xf]
        %v1333 = vld [vmem:[#allocation13 + $0x28] sm:$0xf]
        %v1334 = vld [vmem:[#allocation13 + $0x2c] sm:$0xf]
        %v1335 = vld [vmem:[#allocation13 + $0x30] sm:$0xf]
        %v1336 = vld [vmem:[#allocation13 + $0x34] sm:$0xf]
        %v1337 = vld [vmem:[#allocation13 + $0x38] sm:$0xf]
        %v1338 = vld [vmem:[#allocation13 + $0x3c] sm:$0xf]
        %v1343 = vunpack.c.l.b16 %v1323
        %v1344 = vunpack.c.l.b16 %v1324
        %v1345 = vunpack.c.l.b16 %v1325
        %v1346 = vunpack.c.l.b16 %v1326
        %v1347 = vpack.c.b16 %v1344, %v1343
        %v1348 = vpack.c.b16 %v1346, %v1345
        %v1352 = vsel %vm796, %v1319, 0
        %1354 = vmatprep.subr.bf16.mxu0 0
        %1355 = vmatpush1.bf16.msra.mxu0 %v1347
        %1356 = vmatprep.subr.bf16.mxu0 0
        %1357 = vmatpush1.bf16.msra.mxu0 %v1348
        %1358 = vmatprep.subr.bf16.mxu0 0
        %1359 = vmatpush1.bf16.msra.mxu0 0
        %1360 = vmatprep.subr.bf16.mxu0 0
        %1361 = vmatpush1.bf16.msra.mxu0 0
        %1362 = vmatprep.subr.bf16.mxu0 0
        %1363 = vmatpush1.bf16.msra.mxu0 0
        %1364 = vmatprep.subr.bf16.mxu0 0
        %1365 = vmatpush1.bf16.msra.mxu0 0
        %1366 = vmatprep.subr.bf16.mxu0 0
        %1367 = vmatpush1.bf16.msra.mxu0 0
        %1368 = vmatprep.subr.bf16.mxu0 0
        %1369 = vmatpush1.bf16.msra.mxu0 0
        %1370 = vmatprep.subr.bf16.mxu0 0
        %1371 = vmatpush1.bf16.msra.mxu0 0
        %1372 = vmatprep.subr.bf16.mxu0 0
        %1373 = vmatpush1.bf16.msra.mxu0 0
        %1374 = vmatprep.subr.bf16.mxu0 0
        %1375 = vmatpush1.bf16.msra.mxu0 0
        %1376 = vmatprep.subr.bf16.mxu0 0
        %1377 = vmatpush1.bf16.msra.mxu0 0
        %1378 = vmatprep.subr.bf16.mxu0 0
        %1379 = vmatpush1.bf16.msra.mxu0 0
        %1380 = vmatprep.subr.bf16.mxu0 0
        %1381 = vmatpush1.bf16.msra.mxu0 0
        %1382 = vmatprep.subr.bf16.mxu0 0
        %1383 = vmatpush1.bf16.msra.mxu0 0
        %1384 = vmatprep.subr.bf16.mxu0 0
        %1385 = vmatpush1.bf16.msra.mxu0 0
        %1386 = vmatprep.mubr.bf16.mxu0 0
        %1387 = vmatmul.mubr.bf16.gmra.mrb[0].mxu0 %v1352
        %v1388 = vpop.f32.mrb[0].mxu0
        %v1389 = vadd.f32 0.0, %v1388
        %v1390 = vpop.f32.mrb[0].mxu0
        %v1391 = vpop.f32.mrb[0].mxu0
        %v1392 = vadd.f32 0.0, %v1391
        %v1393 = vpop.f32.mrb[0].mxu0
        %1394 = vdwg.mxu0
        %v1399 = vunpack.c.l.b16 %v1327
        %v1400 = vunpack.c.l.b16 %v1328
        %v1401 = vunpack.c.l.b16 %v1329
        %v1402 = vunpack.c.l.b16 %v1330
        %v1403 = vpack.c.b16 %v1400, %v1399
        %v1404 = vpack.c.b16 %v1402, %v1401
        %v1408 = vsel %vm796, %v1320, 0
        %1410 = vmatprep.subr.bf16.mxu0 0
        %1411 = vmatpush1.bf16.msra.mxu0 %v1403
        %1412 = vmatprep.subr.bf16.mxu0 0
        %1413 = vmatpush1.bf16.msra.mxu0 %v1404
        %1414 = vmatprep.subr.bf16.mxu0 0
        %1415 = vmatpush1.bf16.msra.mxu0 0
        %1416 = vmatprep.subr.bf16.mxu0 0
        %1417 = vmatpush1.bf16.msra.mxu0 0
        %1418 = vmatprep.subr.bf16.mxu0 0
        %1419 = vmatpush1.bf16.msra.mxu0 0
        %1420 = vmatprep.subr.bf16.mxu0 0
        %1421 = vmatpush1.bf16.msra.mxu0 0
        %1422 = vmatprep.subr.bf16.mxu0 0
        %1423 = vmatpush1.bf16.msra.mxu0 0
        %1424 = vmatprep.subr.bf16.mxu0 0
        %1425 = vmatpush1.bf16.msra.mxu0 0
        %1426 = vmatprep.subr.bf16.mxu0 0
        %1427 = vmatpush1.bf16.msra.mxu0 0
        %1428 = vmatprep.subr.bf16.mxu0 0
        %1429 = vmatpush1.bf16.msra.mxu0 0
        %1430 = vmatprep.subr.bf16.mxu0 0
        %1431 = vmatpush1.bf16.msra.mxu0 0
        %1432 = vmatprep.subr.bf16.mxu0 0
        %1433 = vmatpush1.bf16.msra.mxu0 0
        %1434 = vmatprep.subr.bf16.mxu0 0
        %1435 = vmatpush1.bf16.msra.mxu0 0
        %1436 = vmatprep.subr.bf16.mxu0 0
        %1437 = vmatpush1.bf16.msra.mxu0 0
        %1438 = vmatprep.subr.bf16.mxu0 0
        %1439 = vmatpush1.bf16.msra.mxu0 0
        %1440 = vmatprep.subr.bf16.mxu0 0
        %1441 = vmatpush1.bf16.msra.mxu0 0
        %1442 = vmatprep.mubr.bf16.mxu0 0
        %1443 = vmatmul.mubr.bf16.gmra.mrb[0].mxu0 %v1408
        %v1444 = vpop.f32.mrb[0].mxu0
        %v1445 = vadd.f32 0.0, %v1444
        %v1446 = vpop.f32.mrb[0].mxu0
        %v1447 = vpop.f32.mrb[0].mxu0
        %v1448 = vadd.f32 0.0, %v1447
        %v1449 = vpop.f32.mrb[0].mxu0
        %1450 = vdwg.mxu0
        %v1455 = vunpack.c.l.b16 %v1331
        %v1456 = vunpack.c.l.b16 %v1332
        %v1457 = vunpack.c.l.b16 %v1333
        %v1458 = vunpack.c.l.b16 %v1334
        %v1459 = vpack.c.b16 %v1456, %v1455
        %v1460 = vpack.c.b16 %v1458, %v1457
        %v1464 = vsel %vm796, %v1321, 0
        %1466 = vmatprep.subr.bf16.mxu0 0
        %1467 = vmatpush1.bf16.msra.mxu0 %v1459
        %1468 = vmatprep.subr.bf16.mxu0 0
        %1469 = vmatpush1.bf16.msra.mxu0 %v1460
        %1470 = vmatprep.subr.bf16.mxu0 0
        %1471 = vmatpush1.bf16.msra.mxu0 0
        %1472 = vmatprep.subr.bf16.mxu0 0
        %1473 = vmatpush1.bf16.msra.mxu0 0
        %1474 = vmatprep.subr.bf16.mxu0 0
        %1475 = vmatpush1.bf16.msra.mxu0 0
        %1476 = vmatprep.subr.bf16.mxu0 0
        %1477 = vmatpush1.bf16.msra.mxu0 0
        %1478 = vmatprep.subr.bf16.mxu0 0
        %1479 = vmatpush1.bf16.msra.mxu0 0
        %1480 = vmatprep.subr.bf16.mxu0 0
        %1481 = vmatpush1.bf16.msra.mxu0 0
        %1482 = vmatprep.subr.bf16.mxu0 0
        %1483 = vmatpush1.bf16.msra.mxu0 0
        %1484 = vmatprep.subr.bf16.mxu0 0
        %1485 = vmatpush1.bf16.msra.mxu0 0
        %1486 = vmatprep.subr.bf16.mxu0 0
        %1487 = vmatpush1.bf16.msra.mxu0 0
        %1488 = vmatprep.subr.bf16.mxu0 0
        %1489 = vmatpush1.bf16.msra.mxu0 0
        %1490 = vmatprep.subr.bf16.mxu0 0
        %1491 = vmatpush1.bf16.msra.mxu0 0
        %1492 = vmatprep.subr.bf16.mxu0 0
        %1493 = vmatpush1.bf16.msra.mxu0 0
        %1494 = vmatprep.subr.bf16.mxu0 0
        %1495 = vmatpush1.bf16.msra.mxu0 0
        %1496 = vmatprep.subr.bf16.mxu0 0
        %1497 = vmatpush1.bf16.msra.mxu0 0
        %1498 = vmatprep.mubr.bf16.mxu0 0
        %1499 = vmatmul.mubr.bf16.gmra.mrb[0].mxu0 %v1464
        %v1500 = vpop.f32.mrb[0].mxu0
        %v1501 = vadd.f32 0.0, %v1500
        %v1502 = vpop.f32.mrb[0].mxu0
        %v1503 = vpop.f32.mrb[0].mxu0
        %v1504 = vadd.f32 0.0, %v1503
        %v1505 = vpop.f32.mrb[0].mxu0
        %1506 = vdwg.mxu0
        %v1511 = vunpack.c.l.b16 %v1335
        %v1512 = vunpack.c.l.b16 %v1336
        %v1513 = vunpack.c.l.b16 %v1337
        %v1514 = vunpack.c.l.b16 %v1338
        %v1515 = vpack.c.b16 %v1512, %v1511
        %v1516 = vpack.c.b16 %v1514, %v1513
        %v1520 = vsel %vm796, %v1322, 0
        %1522 = vmatprep.subr.bf16.mxu0 0
        %1523 = vmatpush1.bf16.msra.mxu0 %v1515
        %1524 = vmatprep.subr.bf16.mxu0 0
        %1525 = vmatpush1.bf16.msra.mxu0 %v1516
        %1526 = vmatprep.subr.bf16.mxu0 0
        %1527 = vmatpush1.bf16.msra.mxu0 0
        %1528 = vmatprep.subr.bf16.mxu0 0
        %1529 = vmatpush1.bf16.msra.mxu0 0
        %1530 = vmatprep.subr.bf16.mxu0 0
        %1531 = vmatpush1.bf16.msra.mxu0 0
        %1532 = vmatprep.subr.bf16.mxu0 0
        %1533 = vmatpush1.bf16.msra.mxu0 0
        %1534 = vmatprep.subr.bf16.mxu0 0
        %1535 = vmatpush1.bf16.msra.mxu0 0
        %1536 = vmatprep.subr.bf16.mxu0 0
        %1537 = vmatpush1.bf16.msra.mxu0 0
        %1538 = vmatprep.subr.bf16.mxu0 0
        %1539 = vmatpush1.bf16.msra.mxu0 0
        %1540 = vmatprep.subr.bf16.mxu0 0
        %1541 = vmatpush1.bf16.msra.mxu0 0
        %1542 = vmatprep.subr.bf16.mxu0 0
        %1543 = vmatpush1.bf16.msra.mxu0 0
        %1544 = vmatprep.subr.bf16.mxu0 0
        %1545 = vmatpush1.bf16.msra.mxu0 0
        %1546 = vmatprep.subr.bf16.mxu0 0
        %1547 = vmatpush1.bf16.msra.mxu0 0
        %1548 = vmatprep.subr.bf16.mxu0 0
        %1549 = vmatpush1.bf16.msra.mxu0 0
        %1550 = vmatprep.subr.bf16.mxu0 0
        %1551 = vmatpush1.bf16.msra.mxu0 0
        %1552 = vmatprep.subr.bf16.mxu0 0
        %1553 = vmatpush1.bf16.msra.mxu0 0
        %1554 = vmatprep.mubr.bf16.mxu0 0
        %1555 = vmatmul.mubr.bf16.gmra.mrb[0].mxu0 %v1520
        %v1556 = vpop.f32.mrb[0].mxu0
        %v1557 = vadd.f32 0.0, %v1556
        %v1558 = vpop.f32.mrb[0].mxu0
        %v1559 = vpop.f32.mrb[0].mxu0
        %v1560 = vadd.f32 0.0, %v1559
        %v1561 = vpop.f32.mrb[0].mxu0
        %1562 = vdwg.mxu0
        %v1563 = vadd.f32 %v1389, %v1445
        %v1564 = vadd.f32 %v1563, %v1501
        %v1565 = vadd.f32 %v1564, %v1557
        %v1566 = vadd.f32 %v1392, %v1448
        %v1567 = vadd.f32 %v1566, %v1504
        %v1568 = vadd.f32 %v1567, %v1560
        %v1569 = vlaneseq
        %v1570 = vshrl.u32 %v1569, 7
        %v1571 = vsub.s32 7, %v1570
        %v1572 = vrot.slane %v429, %v1571
        %v1573 = vadd.f32 %v1565, %v1572
        %v1574 = vadd.f32 %v1568, %v1572
        %v1575 = vadd.f32 %v427, %v1573
        %v1576 = vadd.f32 %v428, %v1574
        %1577 = vadd.xlane.f32.xlu0 %v1575
        %v1578 = vpop.xlane.xlu0 %1577
        %1579 = vadd.xlane.f32.xlu0 %v1576
        %v1580 = vpop.xlane.xlu0 %1579
        %v1581 = vmul.f32 %v1578, %v436
        %v1582 = vmul.f32 %v1580, %v436
        %v1583 = vsub.f32 %v1575, %v1581
        %v1584 = vsub.f32 %v1576, %v1582
        %v1585 = vmul.f32 %v1583, %v1583
        %v1586 = vmul.f32 %v1584, %v1584
        %1587 = vadd.xlane.f32.xlu0 %v1585
        %v1588 = vpop.xlane.xlu0 %1587
        %1589 = vadd.xlane.f32.xlu0 %v1586
        %v1590 = vpop.xlane.xlu0 %1589
        %v1591 = vmul.f32 %v1588, %v436
        %v1592 = vmul.f32 %v1590, %v436
        %v1593 = vadd.f32 %v1591, 1e-06
        %v1594 = vadd.f32 %v1592, 1e-06
        %v1595 = vrsqrt.pop %v1593
        %v1596 = vrsqrt.pop %v1594
        %v1597 = vmul.f32 %v1583, %v1595
        %v1598 = vmul.f32 %v1584, %v1596
        %v1599 = vlaneseq
        %v1600 = vshrl.u32 %v1599, 7
        %v1601 = vsub.s32 2, %v1600
        %v1602 = vrot.slane %v429, %v1601
        %v1603 = vmul.f32 %v1597, %v1602
        %v1604 = vmul.f32 %v1598, %v1602
        %v1605 = vlaneseq
        %v1606 = vshrl.u32 %v1605, 7
        %v1607 = vsub.s32 3, %v1606
        %v1608 = vrot.slane %v429, %v1607
        %v1609 = vadd.f32 %v1603, %v1608
        %v1610 = vadd.f32 %v1604, %v1608
        %v1611 = vpack.c.bf16 %v1610, %v1609
        %v1612 = vld [vmem:[#allocation14] sm:$0xff]
        %v1613 = vld [vmem:[#allocation14 + $0x8] sm:$0xff]
        %v1614 = vld [vmem:[#allocation14 + $0x10] sm:$0xff]
        %v1615 = vld [vmem:[#allocation14 + $0x18] sm:$0xff]
        %v1616 = vld [vmem:[#allocation14 + $0x20] sm:$0xff]
        %v1617 = vld [vmem:[#allocation14 + $0x28] sm:$0xff]
        %v1618 = vld [vmem:[#allocation14 + $0x30] sm:$0xff]
        %v1619 = vld [vmem:[#allocation14 + $0x38] sm:$0xff]
        %v1620 = vld [vmem:[#allocation14 + $0x40] sm:$0xff]
        %v1621 = vld [vmem:[#allocation14 + $0x48] sm:$0xff]
        %v1622 = vld [vmem:[#allocation14 + $0x50] sm:$0xff]
        %v1623 = vld [vmem:[#allocation14 + $0x58] sm:$0xff]
        %v1624 = vld [vmem:[#allocation14 + $0x60] sm:$0xff]
        %v1625 = vld [vmem:[#allocation14 + $0x68] sm:$0xff]
        %v1626 = vld [vmem:[#allocation14 + $0x70] sm:$0xff]
        %v1627 = vld [vmem:[#allocation14 + $0x78] sm:$0xff]
        %v1628 = vlaneseq
        %v1629 = vshrl.u32 %v1628, 7
        %v1630 = vsub.s32 1, %v1629
        %v1631 = vrot.slane %v430, %v1630
        %v1632 = vlaneseq
        %v1633 = vshrl.u32 %v1632, 7
        %v1634 = vsub.s32 1, %v1633
        %v1635 = vrot.slane %v431, %v1634
        %v1652 = vunpack.c.l.b16 %v1612
        %v1653 = vunpack.c.h.b16 %v1612
        %v1654 = vunpack.c.l.b16 %v1613
        %v1655 = vunpack.c.h.b16 %v1613
        %v1656 = vunpack.c.l.b16 %v1614
        %v1657 = vunpack.c.h.b16 %v1614
        %v1658 = vunpack.c.l.b16 %v1615
        %v1659 = vunpack.c.h.b16 %v1615
        %v1660 = vunpack.c.l.b16 %v1616
        %v1661 = vunpack.c.h.b16 %v1616
        %v1662 = vunpack.c.l.b16 %v1617
        %v1663 = vunpack.c.h.b16 %v1617
        %v1664 = vunpack.c.l.b16 %v1618
        %v1665 = vunpack.c.h.b16 %v1618
        %v1666 = vunpack.c.l.b16 %v1619
        %v1667 = vunpack.c.h.b16 %v1619
        %v1668 = vunpack.c.l.b16 %v1620
        %v1669 = vunpack.c.h.b16 %v1620
        %v1670 = vunpack.c.l.b16 %v1621
        %v1671 = vunpack.c.h.b16 %v1621
        %v1672 = vunpack.c.l.b16 %v1622
        %v1673 = vunpack.c.h.b16 %v1622
        %v1674 = vunpack.c.l.b16 %v1623
        %v1675 = vunpack.c.h.b16 %v1623
        %v1676 = vunpack.c.l.b16 %v1624
        %v1677 = vunpack.c.h.b16 %v1624
        %v1678 = vunpack.c.l.b16 %v1625
        %v1679 = vunpack.c.h.b16 %v1625
        %v1680 = vunpack.c.l.b16 %v1626
        %v1681 = vunpack.c.h.b16 %v1626
        %v1682 = vunpack.c.l.b16 %v1627
        %v1683 = vunpack.c.h.b16 %v1627
        %v1684 = vpack.c.b16 %v1654, %v1652
        %v1685 = vpack.c.b16 %v1655, %v1653
        %v1686 = vpack.c.b16 %v1658, %v1656
        %v1687 = vpack.c.b16 %v1659, %v1657
        %v1688 = vpack.c.b16 %v1662, %v1660
        %v1689 = vpack.c.b16 %v1663, %v1661
        %v1690 = vpack.c.b16 %v1666, %v1664
        %v1691 = vpack.c.b16 %v1667, %v1665
        %v1692 = vpack.c.b16 %v1670, %v1668
        %v1693 = vpack.c.b16 %v1671, %v1669
        %v1694 = vpack.c.b16 %v1674, %v1672
        %v1695 = vpack.c.b16 %v1675, %v1673
        %v1696 = vpack.c.b16 %v1678, %v1676
        %v1697 = vpack.c.b16 %v1679, %v1677
        %v1698 = vpack.c.b16 %v1682, %v1680
        %v1699 = vpack.c.b16 %v1683, %v1681
        %1716 = vmatprep.subr.bf16.mxu0 %v1685
        %1717 = vmatpush1.bf16.msra.mxu0 %v1684
        %1718 = vmatprep.subr.bf16.mxu0 %v1687
        %1719 = vmatpush1.bf16.msra.mxu0 %v1686
        %1720 = vmatprep.subr.bf16.mxu0 %v1689
        %1721 = vmatpush1.bf16.msra.mxu0 %v1688
        %1722 = vmatprep.subr.bf16.mxu0 %v1691
        %1723 = vmatpush1.bf16.msra.mxu0 %v1690
        %1724 = vmatprep.subr.bf16.mxu0 %v1693
        %1725 = vmatpush1.bf16.msra.mxu0 %v1692
        %1726 = vmatprep.subr.bf16.mxu0 %v1695
        %1727 = vmatpush1.bf16.msra.mxu0 %v1694
        %1728 = vmatprep.subr.bf16.mxu0 %v1697
        %1729 = vmatpush1.bf16.msra.mxu0 %v1696
        %1730 = vmatprep.subr.bf16.mxu0 %v1699
        %1731 = vmatpush1.bf16.msra.mxu0 %v1698
        %1732 = vmatprep.subr.bf16.mxu0 0
        %1733 = vmatpush1.bf16.msra.mxu0 0
        %1734 = vmatprep.subr.bf16.mxu0 0
        %1735 = vmatpush1.bf16.msra.mxu0 0
        %1736 = vmatprep.subr.bf16.mxu0 0
        %1737 = vmatpush1.bf16.msra.mxu0 0
        %1738 = vmatprep.subr.bf16.mxu0 0
        %1739 = vmatpush1.bf16.msra.mxu0 0
        %1740 = vmatprep.subr.bf16.mxu0 0
        %1741 = vmatpush1.bf16.msra.mxu0 0
        %1742 = vmatprep.subr.bf16.mxu0 0
        %1743 = vmatpush1.bf16.msra.mxu0 0
        %1744 = vmatprep.subr.bf16.mxu0 0
        %1745 = vmatpush1.bf16.msra.mxu0 0
        %1746 = vmatprep.subr.bf16.mxu0 0
        %1747 = vmatpush1.bf16.msra.mxu0 0
        %1748 = vmatprep.mubr.bf16.mxu0 0
        %1749 = vmatmul.mubr.bf16.gmra.mrb[0].mxu0 %v1611
        %v1750 = vpop.f32.mrb[0].mxu0
        %v1751 = vadd.f32 %v1631, %v1750
        %v1752 = vpop.f32.mrb[0].mxu0
        %v1753 = vadd.f32 %v1635, %v1752
        %v1754 = vpop.f32.mrb[0].mxu0
        %v1755 = vadd.f32 %v1631, %v1754
        %v1756 = vpop.f32.mrb[0].mxu0
        %v1757 = vadd.f32 %v1635, %v1756
        %1758 = vdwg.mxu0
        %v1759 = vmul.f32 %v1751, 0.5
        %v1760 = vmul.f32 %v1753, 0.5
        %v1761 = vmul.f32 %v1755, 0.5
        %v1762 = vmul.f32 %v1757, 0.5
        %v1763 = vmul.f32 %v1751, 0.044715
        %v1764 = vmul.f32 %v1753, 0.044715
        %v1765 = vmul.f32 %v1755, 0.044715
        %v1766 = vmul.f32 %v1757, 0.044715
        %v1767 = vmul.f32 %v1763, %v1751
        %v1768 = vmul.f32 %v1764, %v1753
        %v1769 = vmul.f32 %v1765, %v1755
        %v1770 = vmul.f32 %v1766, %v1757
        %v1771 = vmul.f32 %v1767, %v1751
        %v1772 = vmul.f32 %v1768, %v1753
        %v1773 = vmul.f32 %v1769, %v1755
        %v1774 = vmul.f32 %v1770, %v1757
        %v1775 = vadd.f32 %v1751, %v1771
        %v1776 = vadd.f32 %v1753, %v1772
        %v1777 = vadd.f32 %v1755, %v1773
        %v1778 = vadd.f32 %v1757, %v1774
        %v1779 = vmul.f32 %v1775, 0.7978846
        %v1780 = vmul.f32 %v1776, 0.7978846
        %v1781 = vmul.f32 %v1777, 0.7978846
        %v1782 = vmul.f32 %v1778, 0.7978846
        %v1783 = vtanh.pop %v1779
        %v1784 = vtanh.pop %v1780
        %v1785 = vtanh.pop %v1781
        %v1786 = vtanh.pop %v1782
        %v1787 = vadd.f32 %v1783, 1.0
        %v1788 = vadd.f32 %v1784, 1.0
        %v1789 = vadd.f32 %v1785, 1.0
        %v1790 = vadd.f32 %v1786, 1.0
        %v1791 = vmul.f32 %v1759, %v1787
        %v1792 = vmul.f32 %v1760, %v1788
        %v1793 = vmul.f32 %v1761, %v1789
        %v1794 = vmul.f32 %v1762, %v1790
        %v1795 = vpack.c.bf16 %v1793, %v1791
        %v1796 = vpack.c.bf16 %v1794, %v1792
        %v1797 = vld [vmem:[#allocation16] sm:$0xf]
        %v1798 = vld [vmem:[#allocation16 + $0x4] sm:$0xf]
        %v1799 = vld [vmem:[#allocation16 + $0x8] sm:$0xf]
        %v1800 = vld [vmem:[#allocation16 + $0xc] sm:$0xf]
        %v1801 = vld [vmem:[#allocation16 + $0x10] sm:$0xf]
        %v1802 = vld [vmem:[#allocation16 + $0x14] sm:$0xf]
        %v1803 = vld [vmem:[#allocation16 + $0x18] sm:$0xf]
        %v1804 = vld [vmem:[#allocation16 + $0x1c] sm:$0xf]
        %v1805 = vld [vmem:[#allocation16 + $0x20] sm:$0xf]
        %v1806 = vld [vmem:[#allocation16 + $0x24] sm:$0xf]
        %v1807 = vld [vmem:[#allocation16 + $0x28] sm:$0xf]
        %v1808 = vld [vmem:[#allocation16 + $0x2c] sm:$0xf]
        %v1809 = vld [vmem:[#allocation16 + $0x30] sm:$0xf]
        %v1810 = vld [vmem:[#allocation16 + $0x34] sm:$0xf]
        %v1811 = vld [vmem:[#allocation16 + $0x38] sm:$0xf]
        %v1812 = vld [vmem:[#allocation16 + $0x3c] sm:$0xf]
        %v1813 = vld [vmem:[#allocation16 + $0x40] sm:$0xf]
        %v1814 = vld [vmem:[#allocation16 + $0x44] sm:$0xf]
        %v1815 = vld [vmem:[#allocation16 + $0x48] sm:$0xf]
        %v1816 = vld [vmem:[#allocation16 + $0x4c] sm:$0xf]
        %v1817 = vld [vmem:[#allocation16 + $0x50] sm:$0xf]
        %v1818 = vld [vmem:[#allocation16 + $0x54] sm:$0xf]
        %v1819 = vld [vmem:[#allocation16 + $0x58] sm:$0xf]
        %v1820 = vld [vmem:[#allocation16 + $0x5c] sm:$0xf]
        %v1821 = vld [vmem:[#allocation16 + $0x60] sm:$0xf]
        %v1822 = vld [vmem:[#allocation16 + $0x64] sm:$0xf]
        %v1823 = vld [vmem:[#allocation16 + $0x68] sm:$0xf]
        %v1824 = vld [vmem:[#allocation16 + $0x6c] sm:$0xf]
        %v1825 = vld [vmem:[#allocation16 + $0x70] sm:$0xf]
        %v1826 = vld [vmem:[#allocation16 + $0x74] sm:$0xf]
        %v1827 = vld [vmem:[#allocation16 + $0x78] sm:$0xf]
        %v1828 = vld [vmem:[#allocation16 + $0x7c] sm:$0xf]
        %v1829 = vlaneseq
        %v1830 = vshrl.u32 %v1829, 7
        %v1831 = vsub.s32 0, %v1830
        %v1832 = vrot.slane %v430, %v1831
        %v1865 = vunpack.c.l.b16 %v1797
        %v1866 = vunpack.c.l.b16 %v1798
        %v1867 = vunpack.c.l.b16 %v1799
        %v1868 = vunpack.c.l.b16 %v1800
        %v1869 = vunpack.c.l.b16 %v1801
        %v1870 = vunpack.c.l.b16 %v1802
        %v1871 = vunpack.c.l.b16 %v1803
        %v1872 = vunpack.c.l.b16 %v1804
        %v1873 = vunpack.c.l.b16 %v1805
        %v1874 = vunpack.c.l.b16 %v1806
        %v1875 = vunpack.c.l.b16 %v1807
        %v1876 = vunpack.c.l.b16 %v1808
        %v1877 = vunpack.c.l.b16 %v1809
        %v1878 = vunpack.c.l.b16 %v1810
        %v1879 = vunpack.c.l.b16 %v1811
        %v1880 = vunpack.c.l.b16 %v1812
        %v1881 = vunpack.c.l.b16 %v1813
        %v1882 = vunpack.c.l.b16 %v1814
        %v1883 = vunpack.c.l.b16 %v1815
        %v1884 = vunpack.c.l.b16 %v1816
        %v1885 = vunpack.c.l.b16 %v1817
        %v1886 = vunpack.c.l.b16 %v1818
        %v1887 = vunpack.c.l.b16 %v1819
        %v1888 = vunpack.c.l.b16 %v1820
        %v1889 = vunpack.c.l.b16 %v1821
        %v1890 = vunpack.c.l.b16 %v1822
        %v1891 = vunpack.c.l.b16 %v1823
        %v1892 = vunpack.c.l.b16 %v1824
        %v1893 = vunpack.c.l.b16 %v1825
        %v1894 = vunpack.c.l.b16 %v1826
        %v1895 = vunpack.c.l.b16 %v1827
        %v1896 = vunpack.c.l.b16 %v1828
        %v1897 = vpack.c.b16 %v1866, %v1865
        %v1898 = vpack.c.b16 %v1868, %v1867
        %v1899 = vpack.c.b16 %v1870, %v1869
        %v1900 = vpack.c.b16 %v1872, %v1871
        %v1901 = vpack.c.b16 %v1874, %v1873
        %v1902 = vpack.c.b16 %v1876, %v1875
        %v1903 = vpack.c.b16 %v1878, %v1877
        %v1904 = vpack.c.b16 %v1880, %v1879
        %v1905 = vpack.c.b16 %v1882, %v1881
        %v1906 = vpack.c.b16 %v1884, %v1883
        %v1907 = vpack.c.b16 %v1886, %v1885
        %v1908 = vpack.c.b16 %v1888, %v1887
        %v1909 = vpack.c.b16 %v1890, %v1889
        %v1910 = vpack.c.b16 %v1892, %v1891
        %v1911 = vpack.c.b16 %v1894, %v1893
        %v1912 = vpack.c.b16 %v1896, %v1895
        %1929 = vmatprep.subr.bf16.mxu0 0
        %1930 = vmatpush1.bf16.msra.mxu0 %v1897
        %1931 = vmatprep.subr.bf16.mxu0 0
        %1932 = vmatpush1.bf16.msra.mxu0 %v1898
        %1933 = vmatprep.subr.bf16.mxu0 0
        %1934 = vmatpush1.bf16.msra.mxu0 %v1899
        %1935 = vmatprep.subr.bf16.mxu0 0
        %1936 = vmatpush1.bf16.msra.mxu0 %v1900
        %1937 = vmatprep.subr.bf16.mxu0 0
        %1938 = vmatpush1.bf16.msra.mxu0 %v1901
        %1939 = vmatprep.subr.bf16.mxu0 0
        %1940 = vmatpush1.bf16.msra.mxu0 %v1902
        %1941 = vmatprep.subr.bf16.mxu0 0
        %1942 = vmatpush1.bf16.msra.mxu0 %v1903
        %1943 = vmatprep.subr.bf16.mxu0 0
        %1944 = vmatpush1.bf16.msra.mxu0 %v1904
        %1945 = vmatprep.subr.bf16.mxu0 0
        %1946 = vmatpush1.bf16.msra.mxu0 %v1905
        %1947 = vmatprep.subr.bf16.mxu0 0
        %1948 = vmatpush1.bf16.msra.mxu0 %v1906
        %1949 = vmatprep.subr.bf16.mxu0 0
        %1950 = vmatpush1.bf16.msra.mxu0 %v1907
        %1951 = vmatprep.subr.bf16.mxu0 0
        %1952 = vmatpush1.bf16.msra.mxu0 %v1908
        %1953 = vmatprep.subr.bf16.mxu0 0
        %1954 = vmatpush1.bf16.msra.mxu0 %v1909
        %1955 = vmatprep.subr.bf16.mxu0 0
        %1956 = vmatpush1.bf16.msra.mxu0 %v1910
        %1957 = vmatprep.subr.bf16.mxu0 0
        %1958 = vmatpush1.bf16.msra.mxu0 %v1911
        %1959 = vmatprep.subr.bf16.mxu0 0
        %1960 = vmatpush1.bf16.msra.mxu0 %v1912
        %1961 = vmatprep.mubr.bf16.mxu0 %v1796
        %1962 = vmatmul.mubr.bf16.gmra.mrb[0].mxu0 %v1795
        %v1963 = vpop.f32.mrb[0].mxu0
        %v1964 = vadd.f32 %v1832, %v1963
        %v1965 = vpop.f32.mrb[0].mxu0
        %v1966 = vpop.f32.mrb[0].mxu0
        %v1967 = vadd.f32 %v1832, %v1966
        %v1968 = vpop.f32.mrb[0].mxu0
        %1969 = vdwg.mxu0
        %v1970 = vadd.f32 %v1575, %v1964
        %v1971 = vadd.f32 %v1576, %v1967
        %1972 = vst [vmem:[%s425] sm:$0xff] %v1970
        %1973 = vst [vmem:[%s425 + $0x8] sm:$0xff] %v1971
        %s1974 = sand.u32 %s210, 1
        %s1975 = scalar_lea.sflag [#allocation7], %s1974
        %s1976 = sand.u32 %s210, 1
        %s1977 = smul.addr %s1976, 16
        %s1978 = scalar_lea.vmem [#allocation19], %s1977
        // Predicated region
        $region85: #{tpu_custom_call.1} parent=51 // pred_check
          %p1979 = pneg %p220
        $region86: #{tpu_custom_call.1} parent=51 // pred_check_branch
          %1981 = sbr.rel (%p1979) target = $region88
        $region87: #{tpu_custom_call.1} parent=51 // pred_region
          %s1983 = ssub.s32 256, 256
          %1984 = vsyncadd %s1975, %s1983
          %s1985 = smul.addr %s29, 2
          %s1986 = smul.addr %s1985, 128
          %s1987 = scalar_lea.hbm %s8, %s1986
          %s1988 = sshll.u32 %s1978, 4
          %s1989 = int_to_ptr.vmem [resolvable:$true] %s1988
          %1994 = dma.vmem_to_hbm [thread:$0]  %s1989, 256, %s1987, %s1975, 128, 128, 8
        $region88: #{tpu_custom_call.1} parent=51 // pred_fallthru
          _
      $region52: #{tpu_custom_call.1} parent=5 // pred_fallthru
        _
      %p1995 = scmp.le.s32.totalorder 2, %s24
      // Predicated region
      $region89: #{tpu_custom_call.1} parent=5 // pred_check
        %p1996 = pneg %p1995
      $region90: #{tpu_custom_call.1} parent=5 // pred_check_branch
        %1998 = sbr.rel (%p1996) target = $region92
      $region91: #{tpu_custom_call.1} parent=5 // pred_region
        %s1999 = ssub.s32 %s24, 2
        // Predicated region
        $region93: #{tpu_custom_call.1} parent=91 // pred_check
          %p2000 = pneg %p226
        $region94: #{tpu_custom_call.1} parent=91 // pred_check_branch
          %2002 = sbr.rel (%p2000) target = $region96
        $region95: #{tpu_custom_call.1} parent=91 // pred_region
          %s2003 = sand.u32 %s211, 1
          %s2004 = scalar_lea.sflag [#allocation7], %s2003
          %s2005 = sand.u32 %s211, 1
          %s2006 = smul.addr %s2005, 16
          %s2007 = scalar_lea.vmem [#allocation19], %s2006
          %2008 = dma.done %s2004, 256
        $region96: #{tpu_custom_call.1} parent=91 // pred_fallthru
          _
      $region92: #{tpu_custom_call.1} parent=5 // pred_fallthru
        _
    $region6: #{tpu_custom_call.1} parent=1 // loop_footer
      %s28 = sadd.s32 1, %s24
    $region7: #{tpu_custom_call.1} parent=1 // loop_footer_branch
      %23 = sbr.rel target = $region3
    $region8: #{tpu_custom_call.1} parent=1 // loop_exit
      _
    %2009 = vsyncpa [#allocation6], 1
    %s2010 = scalar_lea.sflag [#allocation6], 1
    %2011 = vsyncpa %s2010, 1
    %2012 = vsyncpa [#allocation9], 1
    %2013 = vsyncpa [#allocation12], 1
    %2014 = vsyncpa [#allocation15], 1
    %2015 = vsyncpa [#allocation18], 1
    %2016 = vsyncpa [#allocation7], 1
    %s2017 = scalar_lea.sflag [#allocation7], 1
    %2018 = vsyncpa %s2017, 1

</llo_original>
